<compile_context>
chip_gen: v6e
topology: v6e:2x2x1
jax: 0.10.0
libtpu: 0.0.40
codegen_flags: <defaults>
</compile_context>

<pallas_src>
import functools

import jax
import jax.numpy as jnp
import numpy as np
from jax.experimental import pallas as pl
from jax.experimental.pallas import tpu as pltpu


def _round_up(x, m):
    return (x + m - 1) // m * m


def build_tap_masks(H, W):
    """9 border masks (one per 3x3 tap), packed into (16, H*W) f32."""
    HW = H * W
    p = np.arange(HW)
    hh, ww = p // W, p % W
    m = np.zeros((16, HW), np.float32)          # 9 used rows, padded to 16 sublanes
    for dy in range(3):
        for dx in range(3):
            ok = ((hh + (dy - 1) >= 0) & (hh + (dy - 1) < H) &
                  (ww + (dx - 1) >= 0) & (ww + (dx - 1) < W))
            m[dy * 3 + dx] = ok.astype(np.float32)
    return jnp.asarray(m)


def pack_params_for_kernel(params, C, mxu_dtype):
    """HWIO weights / (O,) biases -> uniform-C-padded im2col operands."""
    w1, b1, w2, b2, w3, b3, w5, b5 = params

    def col(w_hwio):
        _, _, i, o = w_hwio.shape
        w = jnp.pad(w_hwio, ((0, 0), (0, 0), (0, C - i), (0, C - o)))
        # (3,3,I,O) -> (O,3,3,I) -> (O, 9*I); column k*C + ci matches xcol row.
        return jnp.transpose(w, (3, 0, 1, 2)).reshape(C, 9 * C).astype(mxu_dtype)

    def bias(b):
        return jnp.pad(b.reshape(-1), (0, C - b.size)).reshape(C, 1).astype(jnp.float32)

    return (col(w1), bias(b1), col(w2), bias(b2),
            col(w3), bias(b3), col(w5), bias(b5))


def ecm_kernel(x_ref, m_ref, w1_ref, b1_ref, w2_ref, b2_ref, w3_ref, b3_ref,
               w5_ref, b5_ref, out_ref, xpad_ref, xcol_ref,
               *, H, W, cin, C, mxu_dtype):
    HW = H * W

    # ---- zero-pad the cin input channels to C (multiple of 8) sublanes ----
    xpad_ref[...] = jnp.zeros_like(xpad_ref)
    xpad_ref[0:cin, :] = x_ref[0]
    x0 = xpad_ref[...]                                      # (C, HW) f32

    masks = m_ref[...]                                      # (16, HW) f32, rows 0..8 used

    # Static per-tap lane-roll amounts: xs[:, p] = x[:, p + (dy-1)*W + (dx-1)].
    shifts = tuple((-((dy - 1) * W + (dx - 1))) % HW
                   for dy in range(3) for dx in range(3))

    def conv3x3(x, w_ref, b_ref):
        # im2col via the shared (9*C, HW) scratch: 9 rolled+masked taps, each
        # written to an 8-aligned sublane slice, then ONE MXU matmul.
        for k in range(9):
            s = shifts[k]
            tap = x if s == 0 else pltpu.roll(x, s, axis=1) * masks[k:k + 1, :]
            xcol_ref[k * C:(k + 1) * C, :] = tap
        xcol = xcol_ref[...].astype(mxu_dtype)              # cast only the MXU operand
        return jnp.dot(w_ref[...], xcol,
                       preferred_element_type=jnp.float32) + b_ref[...]

    t1 = jnp.maximum(conv3x3(x0, w1_ref, b1_ref), 0.0)
    t2 = jnp.maximum(conv3x3(t1, w2_ref, b2_ref), 0.0)
    t3 = jnp.maximum(conv3x3(t2, w3_ref, b3_ref), 0.0)
    y = t3 + x0                                             # residual
    out = conv3x3(y, w5_ref, b5_ref)
    out_ref[0] = out[:cin, :].astype(out_ref.dtype)         # unpadded store


def error_calibration_forward(x_nchw, params, num_channels, *, use_bf16_mxu=True):
    """x_nchw: (N, Cin, H, W) float32. Returns (N, Cin, H, W) float32."""
    N, cin, H, W = x_nchw.shape
    HW = H * W
    C = _round_up(max(cin, num_channels), 8)    # uniform channel pad for every conv
    mxu_dtype = jnp.bfloat16 if use_bf16_mxu else jnp.float32

    kp = pack_params_for_kernel(params, C, mxu_dtype)
    masks = build_tap_masks(H, W)

    x_flat = x_nchw.reshape(N, cin, HW)         # pure reshape: no pad, no transpose

    kernel = functools.partial(ecm_kernel, H=H, W=W, cin=cin, C=C,
                               mxu_dtype=mxu_dtype)

    def const2(n):                              # grid-invariant operands
        return (0, 0)

    out_flat = pl.pallas_call(
        kernel,
        out_shape=jax.ShapeDtypeStruct((N, cin, HW), jnp.float32),
        grid_spec=pltpu.PrefetchScalarGridSpec(
            num_scalar_prefetch=0,
            grid=(N,),
            in_specs=[pl.BlockSpec((1, cin, HW), lambda n: (n, 0, 0)),
                      pl.BlockSpec(masks.shape, const2)]
                     + [pl.BlockSpec(a.shape, const2) for a in kp],
            out_specs=pl.BlockSpec((1, cin, HW), lambda n: (n, 0, 0)),
            scratch_shapes=[pltpu.VMEM((C, HW), jnp.float32),
                            pltpu.VMEM((9 * C, HW), jnp.float32)],
        ),
        compiler_params=pltpu.CompilerParams(
            dimension_semantics=("parallel",)),
    )(x_flat, masks, *kp)

    return out_flat.reshape(N, cin, H, W)


def init_params(key, input_channels, num_channels):
    """Deterministic synthetic weights: HWIO (3,3,I,O) + (O,) biases."""
    def wmk(k, i, o):
        return jax.random.normal(k, (3, 3, i, o), jnp.float32) * 0.1

    ks = jax.random.split(key, 8)
    cin, cn = input_channels, num_channels
    return (wmk(ks[0], cin, cn), jax.random.normal(ks[1], (cn,), jnp.float32) * 0.1,
            wmk(ks[2], cn, cn),  jax.random.normal(ks[3], (cn,), jnp.float32) * 0.1,
            wmk(ks[4], cn, cin), jax.random.normal(ks[5], (cin,), jnp.float32) * 0.1,
            wmk(ks[6], cin, cin), jax.random.normal(ks[7], (cin,), jnp.float32) * 0.1)


def reference_forward(x_nchw, params):
    """Pure-JAX reference (lax.conv, f32) matching the PyTorch forward."""
    w1, b1, w2, b2, w3, b3, w5, b5 = params
    x = jnp.transpose(x_nchw, (0, 2, 3, 1))  # NHWC

    def conv(x, w, b):
        y = jax.lax.conv_general_dilated(
            x, w, window_strides=(1, 1), padding="SAME",
            dimension_numbers=("NHWC", "HWIO", "NHWC"))
        return y + b.reshape(1, 1, 1, -1)

    t1 = jax.nn.relu(conv(x, w1, b1))
    t2 = jax.nn.relu(conv(t1, w2, b2))
    t3 = jax.nn.relu(conv(t2, w3, b3))
    y = t3 + x
    out = conv(y, w5, b5)
    return jnp.transpose(out, (0, 3, 1, 2))  # back to NCHW


if __name__ == "__main__":
    key = jax.random.PRNGKey(0)
    k_x, k_p = jax.random.split(key)

    N, Cin, H, W = 2, 4, 16, 16     # input_channels = 4
    num_channels = 8                # hidden conv channels

    x = jax.random.normal(k_x, (N, Cin, H, W), jnp.float32)
    params = init_params(k_p, Cin, num_channels)

    use_bf16 = True                 # bf16 MXU operands (f32 accumulate)
    out = error_calibration_forward(x, params, num_channels, use_bf16_mxu=use_bf16)
    out = jax.block_until_ready(out)

    ref = jax.block_until_ready(reference_forward(x, params))
    tol = 2e-2 if use_bf16 else 1e-4   # bf16 operand quantization across 4 convs
    np.testing.assert_allclose(np.asarray(out), np.asarray(ref), rtol=tol, atol=tol)

    print("KERNEL_OK")
</pallas_src>

<mosaic_0001>
module attributes {stable_mosaic.version = 11 : i64} {
  func.func @ecm_kernel(%arg0: i32, %arg1: memref<1x4x256xf32, #tpu.memory_space<vmem>>, %arg2: memref<16x256xf32, #tpu.memory_space<vmem>>, %arg3: memref<8x72xbf16, #tpu.memory_space<vmem>>, %arg4: memref<8x1xf32, #tpu.memory_space<vmem>>, %arg5: memref<8x72xbf16, #tpu.memory_space<vmem>>, %arg6: memref<8x1xf32, #tpu.memory_space<vmem>>, %arg7: memref<8x72xbf16, #tpu.memory_space<vmem>>, %arg8: memref<8x1xf32, #tpu.memory_space<vmem>>, %arg9: memref<8x72xbf16, #tpu.memory_space<vmem>>, %arg10: memref<8x1xf32, #tpu.memory_space<vmem>>, %arg11: memref<1x4x256xf32, #tpu.memory_space<vmem>>, %arg12: memref<8x256xf32, #tpu.memory_space<vmem>>, %arg13: memref<72x256xf32, #tpu.memory_space<vmem>>) attributes {dimension_semantics = [#tpu.dimension_semantics<parallel>], iteration_bounds = array<i64: 2>, scalar_prefetch = 0 : i64, scratch_operands = 2 : i64, tpu.core_type = #tpu.core_type<tc>, window_params = [{transform_indices = @transform_0, window_bounds = array<i64: 1, 4, 256>}, {pipeline_mode = #tpu.pipeline_mode<synchronous>, transform_indices = @transform_1, window_bounds = array<i64: 16, 256>}, {pipeline_mode = #tpu.pipeline_mode<synchronous>, transform_indices = @transform_2, window_bounds = array<i64: 8, 72>}, {pipeline_mode = #tpu.pipeline_mode<synchronous>, transform_indices = @transform_3, window_bounds = array<i64: 8, 1>}, {pipeline_mode = #tpu.pipeline_mode<synchronous>, transform_indices = @transform_4, window_bounds = array<i64: 8, 72>}, {pipeline_mode = #tpu.pipeline_mode<synchronous>, transform_indices = @transform_5, window_bounds = array<i64: 8, 1>}, {pipeline_mode = #tpu.pipeline_mode<synchronous>, transform_indices = @transform_6, window_bounds = array<i64: 8, 72>}, {pipeline_mode = #tpu.pipeline_mode<synchronous>, transform_indices = @transform_7, window_bounds = array<i64: 8, 1>}, {pipeline_mode = #tpu.pipeline_mode<synchronous>, transform_indices = @transform_8, window_bounds = array<i64: 8, 72>}, {pipeline_mode = #tpu.pipeline_mode<synchronous>, transform_indices = @transform_9, window_bounds = array<i64: 8, 1>}, {transform_indices = @transform_10, window_bounds = array<i64: 1, 4, 256>}]} {
    %cst = arith.constant 0.000000e+00 : f32
    %0 = vector.broadcast %cst : f32 to vector<8x256xf32>
    %c0 = arith.constant 0 : index
    %c0_0 = arith.constant 0 : index
    %1 = vector.load %arg12[%c0, %c0_0] : memref<8x256xf32, #tpu.memory_space<vmem>>, vector<8x256xf32>
    tpu.vector_store %arg12[%c0, %c0_0], %0 {strides = array<i32>} : memref<8x256xf32, #tpu.memory_space<vmem>>, vector<8x256xf32>,
    %c0_1 = arith.constant 0 : index
    %c0_2 = arith.constant 0 : index
    %c0_3 = arith.constant 0 : index
    %2 = vector.load %arg1[%c0_1, %c0_2, %c0_3] : memref<1x4x256xf32, #tpu.memory_space<vmem>>, vector<1x4x256xf32>
    %3 = vector.shape_cast %2 : vector<1x4x256xf32> to vector<4x256xf32>
    %c0_4 = arith.constant 0 : index
    %c0_5 = arith.constant 0 : index
    %4 = vector.load %arg12[%c0_4, %c0_5] : memref<8x256xf32, #tpu.memory_space<vmem>>, vector<4x256xf32>
    tpu.vector_store %arg12[%c0_4, %c0_5], %3 {strides = array<i32>} : memref<8x256xf32, #tpu.memory_space<vmem>>, vector<4x256xf32>,
    %c0_6 = arith.constant 0 : index
    %c0_7 = arith.constant 0 : index
    %5 = vector.load %arg12[%c0_6, %c0_7] : memref<8x256xf32, #tpu.memory_space<vmem>>, vector<8x256xf32>
    %c0_8 = arith.constant 0 : index
    %c0_9 = arith.constant 0 : index
    %6 = vector.load %arg2[%c0_8, %c0_9] : memref<16x256xf32, #tpu.memory_space<vmem>>, vector<16x256xf32>
    %c17_i32 = arith.constant 17 : i32
    %7 = tpu.dynamic_rotate %5 by %c17_i32 dim 1 : vector<8x256xf32>, i32 -> vector<8x256xf32>
    %8 = vector.extract_strided_slice %6 {offsets = [0, 0], sizes = [1, 256], strides = [1, 1]} : vector<16x256xf32> to vector<1x256xf32>
    %9 = vector.broadcast %8 : vector<1x256xf32> to vector<8x256xf32>
    %10 = arith.mulf %7, %9 : vector<8x256xf32>
    %c0_10 = arith.constant 0 : index
    %c0_11 = arith.constant 0 : index
    %11 = vector.load %arg13[%c0_10, %c0_11] : memref<72x256xf32, #tpu.memory_space<vmem>>, vector<8x256xf32>
    tpu.vector_store %arg13[%c0_10, %c0_11], %10 {strides = array<i32>} : memref<72x256xf32, #tpu.memory_space<vmem>>, vector<8x256xf32>,
    %c16_i32 = arith.constant 16 : i32
    %12 = tpu.dynamic_rotate %5 by %c16_i32 dim 1 : vector<8x256xf32>, i32 -> vector<8x256xf32>
    %13 = vector.extract_strided_slice %6 {offsets = [1, 0], sizes = [1, 256], strides = [1, 1]} : vector<16x256xf32> to vector<1x256xf32>
    %14 = vector.broadcast %13 : vector<1x256xf32> to vector<8x256xf32>
    %15 = arith.mulf %12, %14 : vector<8x256xf32>
    %c8 = arith.constant 8 : index
    %c0_12 = arith.constant 0 : index
    %16 = vector.load %arg13[%c8, %c0_12] : memref<72x256xf32, #tpu.memory_space<vmem>>, vector<8x256xf32>
    tpu.vector_store %arg13[%c8, %c0_12], %15 {strides = array<i32>} : memref<72x256xf32, #tpu.memory_space<vmem>>, vector<8x256xf32>,
    %c15_i32 = arith.constant 15 : i32
    %17 = tpu.dynamic_rotate %5 by %c15_i32 dim 1 : vector<8x256xf32>, i32 -> vector<8x256xf32>
    %18 = vector.extract_strided_slice %6 {offsets = [2, 0], sizes = [1, 256], strides = [1, 1]} : vector<16x256xf32> to vector<1x256xf32>
    %19 = vector.broadcast %18 : vector<1x256xf32> to vector<8x256xf32>
    %20 = arith.mulf %17, %19 : vector<8x256xf32>
    %c16 = arith.constant 16 : index
    %c0_13 = arith.constant 0 : index
    %21 = vector.load %arg13[%c16, %c0_13] : memref<72x256xf32, #tpu.memory_space<vmem>>, vector<8x256xf32>
    tpu.vector_store %arg13[%c16, %c0_13], %20 {strides = array<i32>} : memref<72x256xf32, #tpu.memory_space<vmem>>, vector<8x256xf32>,
    %c1_i32 = arith.constant 1 : i32
    %22 = tpu.dynamic_rotate %5 by %c1_i32 dim 1 : vector<8x256xf32>, i32 -> vector<8x256xf32>
    %23 = vector.extract_strided_slice %6 {offsets = [3, 0], sizes = [1, 256], strides = [1, 1]} : vector<16x256xf32> to vector<1x256xf32>
    %24 = vector.broadcast %23 : vector<1x256xf32> to vector<8x256xf32>
    %25 = arith.mulf %22, %24 : vector<8x256xf32>
    %c24 = arith.constant 24 : index
    %c0_14 = arith.constant 0 : index
    %26 = vector.load %arg13[%c24, %c0_14] : memref<72x256xf32, #tpu.memory_space<vmem>>, vector<8x256xf32>
    tpu.vector_store %arg13[%c24, %c0_14], %25 {strides = array<i32>} : memref<72x256xf32, #tpu.memory_space<vmem>>, vector<8x256xf32>,
    %c32 = arith.constant 32 : index
    %c0_15 = arith.constant 0 : index
    %27 = vector.load %arg13[%c32, %c0_15] : memref<72x256xf32, #tpu.memory_space<vmem>>, vector<8x256xf32>
    tpu.vector_store %arg13[%c32, %c0_15], %5 {strides = array<i32>} : memref<72x256xf32, #tpu.memory_space<vmem>>, vector<8x256xf32>,
    %c255_i32 = arith.constant 255 : i32
    %28 = tpu.dynamic_rotate %5 by %c255_i32 dim 1 : vector<8x256xf32>, i32 -> vector<8x256xf32>
    %29 = vector.extract_strided_slice %6 {offsets = [5, 0], sizes = [1, 256], strides = [1, 1]} : vector<16x256xf32> to vector<1x256xf32>
    %30 = vector.broadcast %29 : vector<1x256xf32> to vector<8x256xf32>
    %31 = arith.mulf %28, %30 : vector<8x256xf32>
    %c40 = arith.constant 40 : index
    %c0_16 = arith.constant 0 : index
    %32 = vector.load %arg13[%c40, %c0_16] : memref<72x256xf32, #tpu.memory_space<vmem>>, vector<8x256xf32>
    tpu.vector_store %arg13[%c40, %c0_16], %31 {strides = array<i32>} : memref<72x256xf32, #tpu.memory_space<vmem>>, vector<8x256xf32>,
    %c241_i32 = arith.constant 241 : i32
    %33 = tpu.dynamic_rotate %5 by %c241_i32 dim 1 : vector<8x256xf32>, i32 -> vector<8x256xf32>
    %34 = vector.extract_strided_slice %6 {offsets = [6, 0], sizes = [1, 256], strides = [1, 1]} : vector<16x256xf32> to vector<1x256xf32>
    %35 = vector.broadcast %34 : vector<1x256xf32> to vector<8x256xf32>
    %36 = arith.mulf %33, %35 : vector<8x256xf32>
    %c48 = arith.constant 48 : index
    %c0_17 = arith.constant 0 : index
    %37 = vector.load %arg13[%c48, %c0_17] : memref<72x256xf32, #tpu.memory_space<vmem>>, vector<8x256xf32>
    tpu.vector_store %arg13[%c48, %c0_17], %36 {strides = array<i32>} : memref<72x256xf32, #tpu.memory_space<vmem>>, vector<8x256xf32>,
    %c240_i32 = arith.constant 240 : i32
    %38 = tpu.dynamic_rotate %5 by %c240_i32 dim 1 : vector<8x256xf32>, i32 -> vector<8x256xf32>
    %39 = vector.extract_strided_slice %6 {offsets = [7, 0], sizes = [1, 256], strides = [1, 1]} : vector<16x256xf32> to vector<1x256xf32>
    %40 = vector.broadcast %39 : vector<1x256xf32> to vector<8x256xf32>
    %41 = arith.mulf %38, %40 : vector<8x256xf32>
    %c56 = arith.constant 56 : index
    %c0_18 = arith.constant 0 : index
    %42 = vector.load %arg13[%c56, %c0_18] : memref<72x256xf32, #tpu.memory_space<vmem>>, vector<8x256xf32>
    tpu.vector_store %arg13[%c56, %c0_18], %41 {strides = array<i32>} : memref<72x256xf32, #tpu.memory_space<vmem>>, vector<8x256xf32>,
    %c239_i32 = arith.constant 239 : i32
    %43 = tpu.dynamic_rotate %5 by %c239_i32 dim 1 : vector<8x256xf32>, i32 -> vector<8x256xf32>
    %44 = vector.extract_strided_slice %6 {offsets = [8, 0], sizes = [1, 256], strides = [1, 1]} : vector<16x256xf32> to vector<1x256xf32>
    %45 = vector.broadcast %44 : vector<1x256xf32> to vector<8x256xf32>
    %46 = arith.mulf %43, %45 : vector<8x256xf32>
    %c64 = arith.constant 64 : index
    %c0_19 = arith.constant 0 : index
    %47 = vector.load %arg13[%c64, %c0_19] : memref<72x256xf32, #tpu.memory_space<vmem>>, vector<8x256xf32>
    tpu.vector_store %arg13[%c64, %c0_19], %46 {strides = array<i32>} : memref<72x256xf32, #tpu.memory_space<vmem>>, vector<8x256xf32>,
    %c0_20 = arith.constant 0 : index
    %c0_21 = arith.constant 0 : index
    %48 = vector.load %arg13[%c0_20, %c0_21] : memref<72x256xf32, #tpu.memory_space<vmem>>, vector<72x256xf32>
    %49 = arith.truncf %48 : vector<72x256xf32> to vector<72x256xbf16>
    %c0_22 = arith.constant 0 : index
    %c0_23 = arith.constant 0 : index
    %50 = vector.load %arg3[%c0_22, %c0_23] : memref<8x72xbf16, #tpu.memory_space<vmem>>, vector<8x72xbf16>
    %cst_24 = arith.constant dense<0.000000e+00> : vector<8x256xf32>
    %51 = tpu.matmul %50, %49, %cst_24 {dimension_numbers = #tpu.dot_dimension_numbers<[1], [0], [0], [1], [0, 0, 1, 1], [], []>} : vector<8x72xbf16>, vector<72x256xbf16>, vector<8x256xf32> -> vector<8x256xf32>
    %c0_25 = arith.constant 0 : index
    %c0_26 = arith.constant 0 : index
    %52 = vector.load %arg4[%c0_25, %c0_26] : memref<8x1xf32, #tpu.memory_space<vmem>>, vector<8x1xf32>
    %53 = vector.broadcast %52 : vector<8x1xf32> to vector<8x256xf32>
    %54 = arith.addf %51, %53 : vector<8x256xf32>
    %cst_27 = arith.constant 0.000000e+00 : f32
    %55 = vector.broadcast %cst_27 : f32 to vector<8x256xf32>
    %56 = arith.maximumf %54, %55 : vector<8x256xf32>
    %c17_i32_28 = arith.constant 17 : i32
    %57 = tpu.dynamic_rotate %56 by %c17_i32_28 dim 1 : vector<8x256xf32>, i32 -> vector<8x256xf32>
    %58 = vector.extract_strided_slice %6 {offsets = [0, 0], sizes = [1, 256], strides = [1, 1]} : vector<16x256xf32> to vector<1x256xf32>
    %59 = vector.broadcast %58 : vector<1x256xf32> to vector<8x256xf32>
    %60 = arith.mulf %57, %59 : vector<8x256xf32>
    %c0_29 = arith.constant 0 : index
    %c0_30 = arith.constant 0 : index
    %61 = vector.load %arg13[%c0_29, %c0_30] : memref<72x256xf32, #tpu.memory_space<vmem>>, vector<8x256xf32>
    tpu.vector_store %arg13[%c0_29, %c0_30], %60 {strides = array<i32>} : memref<72x256xf32, #tpu.memory_space<vmem>>, vector<8x256xf32>,
    %c16_i32_31 = arith.constant 16 : i32
    %62 = tpu.dynamic_rotate %56 by %c16_i32_31 dim 1 : vector<8x256xf32>, i32 -> vector<8x256xf32>
    %63 = vector.extract_strided_slice %6 {offsets = [1, 0], sizes = [1, 256], strides = [1, 1]} : vector<16x256xf32> to vector<1x256xf32>
    %64 = vector.broadcast %63 : vector<1x256xf32> to vector<8x256xf32>
    %65 = arith.mulf %62, %64 : vector<8x256xf32>
    %c8_32 = arith.constant 8 : index
    %c0_33 = arith.constant 0 : index
    %66 = vector.load %arg13[%c8_32, %c0_33] : memref<72x256xf32, #tpu.memory_space<vmem>>, vector<8x256xf32>
    tpu.vector_store %arg13[%c8_32, %c0_33], %65 {strides = array<i32>} : memref<72x256xf32, #tpu.memory_space<vmem>>, vector<8x256xf32>,
    %c15_i32_34 = arith.constant 15 : i32
    %67 = tpu.dynamic_rotate %56 by %c15_i32_34 dim 1 : vector<8x256xf32>, i32 -> vector<8x256xf32>
    %68 = vector.extract_strided_slice %6 {offsets = [2, 0], sizes = [1, 256], strides = [1, 1]} : vector<16x256xf32> to vector<1x256xf32>
    %69 = vector.broadcast %68 : vector<1x256xf32> to vector<8x256xf32>
    %70 = arith.mulf %67, %69 : vector<8x256xf32>
    %c16_35 = arith.constant 16 : index
    %c0_36 = arith.constant 0 : index
    %71 = vector.load %arg13[%c16_35, %c0_36] : memref<72x256xf32, #tpu.memory_space<vmem>>, vector<8x256xf32>
    tpu.vector_store %arg13[%c16_35, %c0_36], %70 {strides = array<i32>} : memref<72x256xf32, #tpu.memory_space<vmem>>, vector<8x256xf32>,
    %c1_i32_37 = arith.constant 1 : i32
    %72 = tpu.dynamic_rotate %56 by %c1_i32_37 dim 1 : vector<8x256xf32>, i32 -> vector<8x256xf32>
    %73 = vector.extract_strided_slice %6 {offsets = [3, 0], sizes = [1, 256], strides = [1, 1]} : vector<16x256xf32> to vector<1x256xf32>
    %74 = vector.broadcast %73 : vector<1x256xf32> to vector<8x256xf32>
    %75 = arith.mulf %72, %74 : vector<8x256xf32>
    %c24_38 = arith.constant 24 : index
    %c0_39 = arith.constant 0 : index
    %76 = vector.load %arg13[%c24_38, %c0_39] : memref<72x256xf32, #tpu.memory_space<vmem>>, vector<8x256xf32>
    tpu.vector_store %arg13[%c24_38, %c0_39], %75 {strides = array<i32>} : memref<72x256xf32, #tpu.memory_space<vmem>>, vector<8x256xf32>,
    %c32_40 = arith.constant 32 : index
    %c0_41 = arith.constant 0 : index
    %77 = vector.load %arg13[%c32_40, %c0_41] : memref<72x256xf32, #tpu.memory_space<vmem>>, vector<8x256xf32>
    tpu.vector_store %arg13[%c32_40, %c0_41], %56 {strides = array<i32>} : memref<72x256xf32, #tpu.memory_space<vmem>>, vector<8x256xf32>,
    %c255_i32_42 = arith.constant 255 : i32
    %78 = tpu.dynamic_rotate %56 by %c255_i32_42 dim 1 : vector<8x256xf32>, i32 -> vector<8x256xf32>
    %79 = vector.extract_strided_slice %6 {offsets = [5, 0], sizes = [1, 256], strides = [1, 1]} : vector<16x256xf32> to vector<1x256xf32>
    %80 = vector.broadcast %79 : vector<1x256xf32> to vector<8x256xf32>
    %81 = arith.mulf %78, %80 : vector<8x256xf32>
    %c40_43 = arith.constant 40 : index
    %c0_44 = arith.constant 0 : index
    %82 = vector.load %arg13[%c40_43, %c0_44] : memref<72x256xf32, #tpu.memory_space<vmem>>, vector<8x256xf32>
    tpu.vector_store %arg13[%c40_43, %c0_44], %81 {strides = array<i32>} : memref<72x256xf32, #tpu.memory_space<vmem>>, vector<8x256xf32>,
    %c241_i32_45 = arith.constant 241 : i32
    %83 = tpu.dynamic_rotate %56 by %c241_i32_45 dim 1 : vector<8x256xf32>, i32 -> vector<8x256xf32>
    %84 = vector.extract_strided_slice %6 {offsets = [6, 0], sizes = [1, 256], strides = [1, 1]} : vector<16x256xf32> to vector<1x256xf32>
    %85 = vector.broadcast %84 : vector<1x256xf32> to vector<8x256xf32>
    %86 = arith.mulf %83, %85 : vector<8x256xf32>
    %c48_46 = arith.constant 48 : index
    %c0_47 = arith.constant 0 : index
    %87 = vector.load %arg13[%c48_46, %c0_47] : memref<72x256xf32, #tpu.memory_space<vmem>>, vector<8x256xf32>
    tpu.vector_store %arg13[%c48_46, %c0_47], %86 {strides = array<i32>} : memref<72x256xf32, #tpu.memory_space<vmem>>, vector<8x256xf32>,
    %c240_i32_48 = arith.constant 240 : i32
    %88 = tpu.dynamic_rotate %56 by %c240_i32_48 dim 1 : vector<8x256xf32>, i32 -> vector<8x256xf32>
    %89 = vector.extract_strided_slice %6 {offsets = [7, 0], sizes = [1, 256], strides = [1, 1]} : vector<16x256xf32> to vector<1x256xf32>
    %90 = vector.broadcast %89 : vector<1x256xf32> to vector<8x256xf32>
    %91 = arith.mulf %88, %90 : vector<8x256xf32>
    %c56_49 = arith.constant 56 : index
    %c0_50 = arith.constant 0 : index
    %92 = vector.load %arg13[%c56_49, %c0_50] : memref<72x256xf32, #tpu.memory_space<vmem>>, vector<8x256xf32>
    tpu.vector_store %arg13[%c56_49, %c0_50], %91 {strides = array<i32>} : memref<72x256xf32, #tpu.memory_space<vmem>>, vector<8x256xf32>,
    %c239_i32_51 = arith.constant 239 : i32
    %93 = tpu.dynamic_rotate %56 by %c239_i32_51 dim 1 : vector<8x256xf32>, i32 -> vector<8x256xf32>
    %94 = vector.extract_strided_slice %6 {offsets = [8, 0], sizes = [1, 256], strides = [1, 1]} : vector<16x256xf32> to vector<1x256xf32>
    %95 = vector.broadcast %94 : vector<1x256xf32> to vector<8x256xf32>
    %96 = arith.mulf %93, %95 : vector<8x256xf32>
    %c64_52 = arith.constant 64 : index
    %c0_53 = arith.constant 0 : index
    %97 = vector.load %arg13[%c64_52, %c0_53] : memref<72x256xf32, #tpu.memory_space<vmem>>, vector<8x256xf32>
    tpu.vector_store %arg13[%c64_52, %c0_53], %96 {strides = array<i32>} : memref<72x256xf32, #tpu.memory_space<vmem>>, vector<8x256xf32>,
    %c0_54 = arith.constant 0 : index
    %c0_55 = arith.constant 0 : index
    %98 = vector.load %arg13[%c0_54, %c0_55] : memref<72x256xf32, #tpu.memory_space<vmem>>, vector<72x256xf32>
    %99 = arith.truncf %98 : vector<72x256xf32> to vector<72x256xbf16>
    %c0_56 = arith.constant 0 : index
    %c0_57 = arith.constant 0 : index
    %100 = vector.load %arg5[%c0_56, %c0_57] : memref<8x72xbf16, #tpu.memory_space<vmem>>, vector<8x72xbf16>
    %cst_58 = arith.constant dense<0.000000e+00> : vector<8x256xf32>
    %101 = tpu.matmul %100, %99, %cst_58 {dimension_numbers = #tpu.dot_dimension_numbers<[1], [0], [0], [1], [0, 0, 1, 1], [], []>} : vector<8x72xbf16>, vector<72x256xbf16>, vector<8x256xf32> -> vector<8x256xf32>
    %c0_59 = arith.constant 0 : index
    %c0_60 = arith.constant 0 : index
    %102 = vector.load %arg6[%c0_59, %c0_60] : memref<8x1xf32, #tpu.memory_space<vmem>>, vector<8x1xf32>
    %103 = vector.broadcast %102 : vector<8x1xf32> to vector<8x256xf32>
    %104 = arith.addf %101, %103 : vector<8x256xf32>
    %cst_61 = arith.constant 0.000000e+00 : f32
    %105 = vector.broadcast %cst_61 : f32 to vector<8x256xf32>
    %106 = arith.maximumf %104, %105 : vector<8x256xf32>
    %c17_i32_62 = arith.constant 17 : i32
    %107 = tpu.dynamic_rotate %106 by %c17_i32_62 dim 1 : vector<8x256xf32>, i32 -> vector<8x256xf32>
    %108 = vector.extract_strided_slice %6 {offsets = [0, 0], sizes = [1, 256], strides = [1, 1]} : vector<16x256xf32> to vector<1x256xf32>
    %109 = vector.broadcast %108 : vector<1x256xf32> to vector<8x256xf32>
    %110 = arith.mulf %107, %109 : vector<8x256xf32>
    %c0_63 = arith.constant 0 : index
    %c0_64 = arith.constant 0 : index
    %111 = vector.load %arg13[%c0_63, %c0_64] : memref<72x256xf32, #tpu.memory_space<vmem>>, vector<8x256xf32>
    tpu.vector_store %arg13[%c0_63, %c0_64], %110 {strides = array<i32>} : memref<72x256xf32, #tpu.memory_space<vmem>>, vector<8x256xf32>,
    %c16_i32_65 = arith.constant 16 : i32
    %112 = tpu.dynamic_rotate %106 by %c16_i32_65 dim 1 : vector<8x256xf32>, i32 -> vector<8x256xf32>
    %113 = vector.extract_strided_slice %6 {offsets = [1, 0], sizes = [1, 256], strides = [1, 1]} : vector<16x256xf32> to vector<1x256xf32>
    %114 = vector.broadcast %113 : vector<1x256xf32> to vector<8x256xf32>
    %115 = arith.mulf %112, %114 : vector<8x256xf32>
    %c8_66 = arith.constant 8 : index
    %c0_67 = arith.constant 0 : index
    %116 = vector.load %arg13[%c8_66, %c0_67] : memref<72x256xf32, #tpu.memory_space<vmem>>, vector<8x256xf32>
    tpu.vector_store %arg13[%c8_66, %c0_67], %115 {strides = array<i32>} : memref<72x256xf32, #tpu.memory_space<vmem>>, vector<8x256xf32>,
    %c15_i32_68 = arith.constant 15 : i32
    %117 = tpu.dynamic_rotate %106 by %c15_i32_68 dim 1 : vector<8x256xf32>, i32 -> vector<8x256xf32>
    %118 = vector.extract_strided_slice %6 {offsets = [2, 0], sizes = [1, 256], strides = [1, 1]} : vector<16x256xf32> to vector<1x256xf32>
    %119 = vector.broadcast %118 : vector<1x256xf32> to vector<8x256xf32>
    %120 = arith.mulf %117, %119 : vector<8x256xf32>
    %c16_69 = arith.constant 16 : index
    %c0_70 = arith.constant 0 : index
    %121 = vector.load %arg13[%c16_69, %c0_70] : memref<72x256xf32, #tpu.memory_space<vmem>>, vector<8x256xf32>
    tpu.vector_store %arg13[%c16_69, %c0_70], %120 {strides = array<i32>} : memref<72x256xf32, #tpu.memory_space<vmem>>, vector<8x256xf32>,
    %c1_i32_71 = arith.constant 1 : i32
    %122 = tpu.dynamic_rotate %106 by %c1_i32_71 dim 1 : vector<8x256xf32>, i32 -> vector<8x256xf32>
    %123 = vector.extract_strided_slice %6 {offsets = [3, 0], sizes = [1, 256], strides = [1, 1]} : vector<16x256xf32> to vector<1x256xf32>
    %124 = vector.broadcast %123 : vector<1x256xf32> to vector<8x256xf32>
    %125 = arith.mulf %122, %124 : vector<8x256xf32>
    %c24_72 = arith.constant 24 : index
    %c0_73 = arith.constant 0 : index
    %126 = vector.load %arg13[%c24_72, %c0_73] : memref<72x256xf32, #tpu.memory_space<vmem>>, vector<8x256xf32>
    tpu.vector_store %arg13[%c24_72, %c0_73], %125 {strides = array<i32>} : memref<72x256xf32, #tpu.memory_space<vmem>>, vector<8x256xf32>,
    %c32_74 = arith.constant 32 : index
    %c0_75 = arith.constant 0 : index
    %127 = vector.load %arg13[%c32_74, %c0_75] : memref<72x256xf32, #tpu.memory_space<vmem>>, vector<8x256xf32>
    tpu.vector_store %arg13[%c32_74, %c0_75], %106 {strides = array<i32>} : memref<72x256xf32, #tpu.memory_space<vmem>>, vector<8x256xf32>,
    %c255_i32_76 = arith.constant 255 : i32
    %128 = tpu.dynamic_rotate %106 by %c255_i32_76 dim 1 : vector<8x256xf32>, i32 -> vector<8x256xf32>
    %129 = vector.extract_strided_slice %6 {offsets = [5, 0], sizes = [1, 256], strides = [1, 1]} : vector<16x256xf32> to vector<1x256xf32>
    %130 = vector.broadcast %129 : vector<1x256xf32> to vector<8x256xf32>
    %131 = arith.mulf %128, %130 : vector<8x256xf32>
    %c40_77 = arith.constant 40 : index
    %c0_78 = arith.constant 0 : index
    %132 = vector.load %arg13[%c40_77, %c0_78] : memref<72x256xf32, #tpu.memory_space<vmem>>, vector<8x256xf32>
    tpu.vector_store %arg13[%c40_77, %c0_78], %131 {strides = array<i32>} : memref<72x256xf32, #tpu.memory_space<vmem>>, vector<8x256xf32>,
    %c241_i32_79 = arith.constant 241 : i32
    %133 = tpu.dynamic_rotate %106 by %c241_i32_79 dim 1 : vector<8x256xf32>, i32 -> vector<8x256xf32>
    %134 = vector.extract_strided_slice %6 {offsets = [6, 0], sizes = [1, 256], strides = [1, 1]} : vector<16x256xf32> to vector<1x256xf32>
    %135 = vector.broadcast %134 : vector<1x256xf32> to vector<8x256xf32>
    %136 = arith.mulf %133, %135 : vector<8x256xf32>
    %c48_80 = arith.constant 48 : index
    %c0_81 = arith.constant 0 : index
    %137 = vector.load %arg13[%c48_80, %c0_81] : memref<72x256xf32, #tpu.memory_space<vmem>>, vector<8x256xf32>
    tpu.vector_store %arg13[%c48_80, %c0_81], %136 {strides = array<i32>} : memref<72x256xf32, #tpu.memory_space<vmem>>, vector<8x256xf32>,
    %c240_i32_82 = arith.constant 240 : i32
    %138 = tpu.dynamic_rotate %106 by %c240_i32_82 dim 1 : vector<8x256xf32>, i32 -> vector<8x256xf32>
    %139 = vector.extract_strided_slice %6 {offsets = [7, 0], sizes = [1, 256], strides = [1, 1]} : vector<16x256xf32> to vector<1x256xf32>
    %140 = vector.broadcast %139 : vector<1x256xf32> to vector<8x256xf32>
    %141 = arith.mulf %138, %140 : vector<8x256xf32>
    %c56_83 = arith.constant 56 : index
    %c0_84 = arith.constant 0 : index
    %142 = vector.load %arg13[%c56_83, %c0_84] : memref<72x256xf32, #tpu.memory_space<vmem>>, vector<8x256xf32>
    tpu.vector_store %arg13[%c56_83, %c0_84], %141 {strides = array<i32>} : memref<72x256xf32, #tpu.memory_space<vmem>>, vector<8x256xf32>,
    %c239_i32_85 = arith.constant 239 : i32
    %143 = tpu.dynamic_rotate %106 by %c239_i32_85 dim 1 : vector<8x256xf32>, i32 -> vector<8x256xf32>
    %144 = vector.extract_strided_slice %6 {offsets = [8, 0], sizes = [1, 256], strides = [1, 1]} : vector<16x256xf32> to vector<1x256xf32>
    %145 = vector.broadcast %144 : vector<1x256xf32> to vector<8x256xf32>
    %146 = arith.mulf %143, %145 : vector<8x256xf32>
    %c64_86 = arith.constant 64 : index
    %c0_87 = arith.constant 0 : index
    %147 = vector.load %arg13[%c64_86, %c0_87] : memref<72x256xf32, #tpu.memory_space<vmem>>, vector<8x256xf32>
    tpu.vector_store %arg13[%c64_86, %c0_87], %146 {strides = array<i32>} : memref<72x256xf32, #tpu.memory_space<vmem>>, vector<8x256xf32>,
    %c0_88 = arith.constant 0 : index
    %c0_89 = arith.constant 0 : index
    %148 = vector.load %arg13[%c0_88, %c0_89] : memref<72x256xf32, #tpu.memory_space<vmem>>, vector<72x256xf32>
    %149 = arith.truncf %148 : vector<72x256xf32> to vector<72x256xbf16>
    %c0_90 = arith.constant 0 : index
    %c0_91 = arith.constant 0 : index
    %150 = vector.load %arg7[%c0_90, %c0_91] : memref<8x72xbf16, #tpu.memory_space<vmem>>, vector<8x72xbf16>
    %cst_92 = arith.constant dense<0.000000e+00> : vector<8x256xf32>
    %151 = tpu.matmul %150, %149, %cst_92 {dimension_numbers = #tpu.dot_dimension_numbers<[1], [0], [0], [1], [0, 0, 1, 1], [], []>} : vector<8x72xbf16>, vector<72x256xbf16>, vector<8x256xf32> -> vector<8x256xf32>
    %c0_93 = arith.constant 0 : index
    %c0_94 = arith.constant 0 : index
    %152 = vector.load %arg8[%c0_93, %c0_94] : memref<8x1xf32, #tpu.memory_space<vmem>>, vector<8x1xf32>
    %153 = vector.broadcast %152 : vector<8x1xf32> to vector<8x256xf32>
    %154 = arith.addf %151, %153 : vector<8x256xf32>
    %cst_95 = arith.constant 0.000000e+00 : f32
    %155 = vector.broadcast %cst_95 : f32 to vector<8x256xf32>
    %156 = arith.maximumf %154, %155 : vector<8x256xf32>
    %157 = arith.addf %156, %5 : vector<8x256xf32>
    %c17_i32_96 = arith.constant 17 : i32
    %158 = tpu.dynamic_rotate %157 by %c17_i32_96 dim 1 : vector<8x256xf32>, i32 -> vector<8x256xf32>
    %159 = vector.extract_strided_slice %6 {offsets = [0, 0], sizes = [1, 256], strides = [1, 1]} : vector<16x256xf32> to vector<1x256xf32>
    %160 = vector.broadcast %159 : vector<1x256xf32> to vector<8x256xf32>
    %161 = arith.mulf %158, %160 : vector<8x256xf32>
    %c0_97 = arith.constant 0 : index
    %c0_98 = arith.constant 0 : index
    %162 = vector.load %arg13[%c0_97, %c0_98] : memref<72x256xf32, #tpu.memory_space<vmem>>, vector<8x256xf32>
    tpu.vector_store %arg13[%c0_97, %c0_98], %161 {strides = array<i32>} : memref<72x256xf32, #tpu.memory_space<vmem>>, vector<8x256xf32>,
    %c16_i32_99 = arith.constant 16 : i32
    %163 = tpu.dynamic_rotate %157 by %c16_i32_99 dim 1 : vector<8x256xf32>, i32 -> vector<8x256xf32>
    %164 = vector.extract_strided_slice %6 {offsets = [1, 0], sizes = [1, 256], strides = [1, 1]} : vector<16x256xf32> to vector<1x256xf32>
    %165 = vector.broadcast %164 : vector<1x256xf32> to vector<8x256xf32>
    %166 = arith.mulf %163, %165 : vector<8x256xf32>
    %c8_100 = arith.constant 8 : index
    %c0_101 = arith.constant 0 : index
    %167 = vector.load %arg13[%c8_100, %c0_101] : memref<72x256xf32, #tpu.memory_space<vmem>>, vector<8x256xf32>
    tpu.vector_store %arg13[%c8_100, %c0_101], %166 {strides = array<i32>} : memref<72x256xf32, #tpu.memory_space<vmem>>, vector<8x256xf32>,
    %c15_i32_102 = arith.constant 15 : i32
    %168 = tpu.dynamic_rotate %157 by %c15_i32_102 dim 1 : vector<8x256xf32>, i32 -> vector<8x256xf32>
    %169 = vector.extract_strided_slice %6 {offsets = [2, 0], sizes = [1, 256], strides = [1, 1]} : vector<16x256xf32> to vector<1x256xf32>
    %170 = vector.broadcast %169 : vector<1x256xf32> to vector<8x256xf32>
    %171 = arith.mulf %168, %170 : vector<8x256xf32>
    %c16_103 = arith.constant 16 : index
    %c0_104 = arith.constant 0 : index
    %172 = vector.load %arg13[%c16_103, %c0_104] : memref<72x256xf32, #tpu.memory_space<vmem>>, vector<8x256xf32>
    tpu.vector_store %arg13[%c16_103, %c0_104], %171 {strides = array<i32>} : memref<72x256xf32, #tpu.memory_space<vmem>>, vector<8x256xf32>,
    %c1_i32_105 = arith.constant 1 : i32
    %173 = tpu.dynamic_rotate %157 by %c1_i32_105 dim 1 : vector<8x256xf32>, i32 -> vector<8x256xf32>
    %174 = vector.extract_strided_slice %6 {offsets = [3, 0], sizes = [1, 256], strides = [1, 1]} : vector<16x256xf32> to vector<1x256xf32>
    %175 = vector.broadcast %174 : vector<1x256xf32> to vector<8x256xf32>
    %176 = arith.mulf %173, %175 : vector<8x256xf32>
    %c24_106 = arith.constant 24 : index
    %c0_107 = arith.constant 0 : index
    %177 = vector.load %arg13[%c24_106, %c0_107] : memref<72x256xf32, #tpu.memory_space<vmem>>, vector<8x256xf32>
    tpu.vector_store %arg13[%c24_106, %c0_107], %176 {strides = array<i32>} : memref<72x256xf32, #tpu.memory_space<vmem>>, vector<8x256xf32>,
    %c32_108 = arith.constant 32 : index
    %c0_109 = arith.constant 0 : index
    %178 = vector.load %arg13[%c32_108, %c0_109] : memref<72x256xf32, #tpu.memory_space<vmem>>, vector<8x256xf32>
    tpu.vector_store %arg13[%c32_108, %c0_109], %157 {strides = array<i32>} : memref<72x256xf32, #tpu.memory_space<vmem>>, vector<8x256xf32>,
    %c255_i32_110 = arith.constant 255 : i32
    %179 = tpu.dynamic_rotate %157 by %c255_i32_110 dim 1 : vector<8x256xf32>, i32 -> vector<8x256xf32>
    %180 = vector.extract_strided_slice %6 {offsets = [5, 0], sizes = [1, 256], strides = [1, 1]} : vector<16x256xf32> to vector<1x256xf32>
    %181 = vector.broadcast %180 : vector<1x256xf32> to vector<8x256xf32>
    %182 = arith.mulf %179, %181 : vector<8x256xf32>
    %c40_111 = arith.constant 40 : index
    %c0_112 = arith.constant 0 : index
    %183 = vector.load %arg13[%c40_111, %c0_112] : memref<72x256xf32, #tpu.memory_space<vmem>>, vector<8x256xf32>
    tpu.vector_store %arg13[%c40_111, %c0_112], %182 {strides = array<i32>} : memref<72x256xf32, #tpu.memory_space<vmem>>, vector<8x256xf32>,
    %c241_i32_113 = arith.constant 241 : i32
    %184 = tpu.dynamic_rotate %157 by %c241_i32_113 dim 1 : vector<8x256xf32>, i32 -> vector<8x256xf32>
    %185 = vector.extract_strided_slice %6 {offsets = [6, 0], sizes = [1, 256], strides = [1, 1]} : vector<16x256xf32> to vector<1x256xf32>
    %186 = vector.broadcast %185 : vector<1x256xf32> to vector<8x256xf32>
    %187 = arith.mulf %184, %186 : vector<8x256xf32>
    %c48_114 = arith.constant 48 : index
    %c0_115 = arith.constant 0 : index
    %188 = vector.load %arg13[%c48_114, %c0_115] : memref<72x256xf32, #tpu.memory_space<vmem>>, vector<8x256xf32>
    tpu.vector_store %arg13[%c48_114, %c0_115], %187 {strides = array<i32>} : memref<72x256xf32, #tpu.memory_space<vmem>>, vector<8x256xf32>,
    %c240_i32_116 = arith.constant 240 : i32
    %189 = tpu.dynamic_rotate %157 by %c240_i32_116 dim 1 : vector<8x256xf32>, i32 -> vector<8x256xf32>
    %190 = vector.extract_strided_slice %6 {offsets = [7, 0], sizes = [1, 256], strides = [1, 1]} : vector<16x256xf32> to vector<1x256xf32>
    %191 = vector.broadcast %190 : vector<1x256xf32> to vector<8x256xf32>
    %192 = arith.mulf %189, %191 : vector<8x256xf32>
    %c56_117 = arith.constant 56 : index
    %c0_118 = arith.constant 0 : index
    %193 = vector.load %arg13[%c56_117, %c0_118] : memref<72x256xf32, #tpu.memory_space<vmem>>, vector<8x256xf32>
    tpu.vector_store %arg13[%c56_117, %c0_118], %192 {strides = array<i32>} : memref<72x256xf32, #tpu.memory_space<vmem>>, vector<8x256xf32>,
    %c239_i32_119 = arith.constant 239 : i32
    %194 = tpu.dynamic_rotate %157 by %c239_i32_119 dim 1 : vector<8x256xf32>, i32 -> vector<8x256xf32>
    %195 = vector.extract_strided_slice %6 {offsets = [8, 0], sizes = [1, 256], strides = [1, 1]} : vector<16x256xf32> to vector<1x256xf32>
    %196 = vector.broadcast %195 : vector<1x256xf32> to vector<8x256xf32>
    %197 = arith.mulf %194, %196 : vector<8x256xf32>
    %c64_120 = arith.constant 64 : index
    %c0_121 = arith.constant 0 : index
    %198 = vector.load %arg13[%c64_120, %c0_121] : memref<72x256xf32, #tpu.memory_space<vmem>>, vector<8x256xf32>
    tpu.vector_store %arg13[%c64_120, %c0_121], %197 {strides = array<i32>} : memref<72x256xf32, #tpu.memory_space<vmem>>, vector<8x256xf32>,
    %c0_122 = arith.constant 0 : index
    %c0_123 = arith.constant 0 : index
    %199 = vector.load %arg13[%c0_122, %c0_123] : memref<72x256xf32, #tpu.memory_space<vmem>>, vector<72x256xf32>
    %200 = arith.truncf %199 : vector<72x256xf32> to vector<72x256xbf16>
    %c0_124 = arith.constant 0 : index
    %c0_125 = arith.constant 0 : index
    %201 = vector.load %arg9[%c0_124, %c0_125] : memref<8x72xbf16, #tpu.memory_space<vmem>>, vector<8x72xbf16>
    %cst_126 = arith.constant dense<0.000000e+00> : vector<8x256xf32>
    %202 = tpu.matmul %201, %200, %cst_126 {dimension_numbers = #tpu.dot_dimension_numbers<[1], [0], [0], [1], [0, 0, 1, 1], [], []>} : vector<8x72xbf16>, vector<72x256xbf16>, vector<8x256xf32> -> vector<8x256xf32>
    %c0_127 = arith.constant 0 : index
    %c0_128 = arith.constant 0 : index
    %203 = vector.load %arg10[%c0_127, %c0_128] : memref<8x1xf32, #tpu.memory_space<vmem>>, vector<8x1xf32>
    %204 = vector.broadcast %203 : vector<8x1xf32> to vector<8x256xf32>
    %205 = arith.addf %202, %204 : vector<8x256xf32>
    %206 = vector.extract_strided_slice %205 {offsets = [0, 0], sizes = [4, 256], strides = [1, 1]} : vector<8x256xf32> to vector<4x256xf32>
    %c0_129 = arith.constant 0 : index
    %c0_130 = arith.constant 0 : index
    %c0_131 = arith.constant 0 : index
    %207 = vector.load %arg11[%c0_129, %c0_130, %c0_131] : memref<1x4x256xf32, #tpu.memory_space<vmem>>, vector<1x4x256xf32>
    %208 = vector.shape_cast %207 : vector<1x4x256xf32> to vector<4x256xf32>
    %209 = vector.shape_cast %206 : vector<4x256xf32> to vector<1x4x256xf32>
    tpu.vector_store %arg11[%c0_129, %c0_130, %c0_131], %209 {strides = array<i32>} : memref<1x4x256xf32, #tpu.memory_space<vmem>>, vector<1x4x256xf32>,
    return
  }
  func.func @transform_0(%arg0: i32) -> (i32, i32, i32) {
    %c0_i32 = arith.constant 0 : i32
    %c0_i32_0 = arith.constant 0 : i32
    %c0_i32_1 = arith.constant 0 : i32
    return %arg0, %c0_i32, %c0_i32_0 : i32, i32, i32
  }
  func.func @transform_1(%arg0: i32) -> (i32, i32) {
    %c0_i32 = arith.constant 0 : i32
    %c0_i32_0 = arith.constant 0 : i32
    %c0_i32_1 = arith.constant 0 : i32
    return %c0_i32, %c0_i32_0 : i32, i32
  }
  func.func @transform_2(%arg0: i32) -> (i32, i32) {
    %c0_i32 = arith.constant 0 : i32
    %c0_i32_0 = arith.constant 0 : i32
    %c0_i32_1 = arith.constant 0 : i32
    return %c0_i32, %c0_i32_0 : i32, i32
  }
  func.func @transform_3(%arg0: i32) -> (i32, i32) {
    %c0_i32 = arith.constant 0 : i32
    %c0_i32_0 = arith.constant 0 : i32
    %c0_i32_1 = arith.constant 0 : i32
    return %c0_i32, %c0_i32_0 : i32, i32
  }
  func.func @transform_4(%arg0: i32) -> (i32, i32) {
    %c0_i32 = arith.constant 0 : i32
    %c0_i32_0 = arith.constant 0 : i32
    %c0_i32_1 = arith.constant 0 : i32
    return %c0_i32, %c0_i32_0 : i32, i32
  }
  func.func @transform_5(%arg0: i32) -> (i32, i32) {
    %c0_i32 = arith.constant 0 : i32
    %c0_i32_0 = arith.constant 0 : i32
    %c0_i32_1 = arith.constant 0 : i32
    return %c0_i32, %c0_i32_0 : i32, i32
  }
  func.func @transform_6(%arg0: i32) -> (i32, i32) {
    %c0_i32 = arith.constant 0 : i32
    %c0_i32_0 = arith.constant 0 : i32
    %c0_i32_1 = arith.constant 0 : i32
    return %c0_i32, %c0_i32_0 : i32, i32
  }
  func.func @transform_7(%arg0: i32) -> (i32, i32) {
    %c0_i32 = arith.constant 0 : i32
    %c0_i32_0 = arith.constant 0 : i32
    %c0_i32_1 = arith.constant 0 : i32
    return %c0_i32, %c0_i32_0 : i32, i32
  }
  func.func @transform_8(%arg0: i32) -> (i32, i32) {
    %c0_i32 = arith.constant 0 : i32
    %c0_i32_0 = arith.constant 0 : i32
    %c0_i32_1 = arith.constant 0 : i32
    return %c0_i32, %c0_i32_0 : i32, i32
  }
  func.func @transform_9(%arg0: i32) -> (i32, i32) {
    %c0_i32 = arith.constant 0 : i32
    %c0_i32_0 = arith.constant 0 : i32
    %c0_i32_1 = arith.constant 0 : i32
    return %c0_i32, %c0_i32_0 : i32, i32
  }
  func.func @transform_10(%arg0: i32) -> (i32, i32, i32) {
    %c0_i32 = arith.constant 0 : i32
    %c0_i32_0 = arith.constant 0 : i32
    %c0_i32_1 = arith.constant 0 : i32
    return %arg0, %c0_i32, %c0_i32_0 : i32, i32, i32
  }
}

</mosaic_0001>

<llo_original>
// kernel: tpu_custom_call.1
$region0: #{tpu_custom_call.1}
  #allocation0 [shape = 'u32[]', space=smem, size = 0x4, offset = 0x4, fixed_abs, tag = 'smem constant byte address 0x4 - core index']
  #allocation1 [shape = 'u32[144,128]{1,0:T(1,128)}', space=vmem, size = 0x12000, scoped, tag = 'internal scratch']
  #allocation2 [shape = 'f32[8,256]{1,0:T(8,128)}', space=vmem, size = 0x2000, scoped, tag = 'scratch operand']
  #allocation3 [shape = 'f32[72,256]{1,0:T(8,128)}', space=vmem, size = 0x12000, scoped, tag = 'scratch operand']
  %s0 = inlined_call_operand.hbm [shape: f32[2,4,256], index: 0, kind: input, shape index: {}]
  %s1 = inlined_call_operand.vmem [shape: f32[16,256], index: 1, kind: input, shape index: {}]
  %s2 = inlined_call_operand.vmem [shape: bf16[8,72], index: 2, kind: input, shape index: {}]
  %s3 = inlined_call_operand.vmem [shape: f32[8,1], index: 3, kind: input, shape index: {}]
  %s4 = inlined_call_operand.vmem [shape: bf16[8,72], index: 4, kind: input, shape index: {}]
  %s5 = inlined_call_operand.vmem [shape: f32[8,1], index: 5, kind: input, shape index: {}]
  %s6 = inlined_call_operand.vmem [shape: bf16[8,72], index: 6, kind: input, shape index: {}]
  %s7 = inlined_call_operand.vmem [shape: f32[8,1], index: 7, kind: input, shape index: {}]
  %s8 = inlined_call_operand.vmem [shape: bf16[8,72], index: 8, kind: input, shape index: {}]
  %s9 = inlined_call_operand.vmem [shape: f32[8,1], index: 9, kind: input, shape index: {}]
  %s10 = inlined_call_operand.hbm [shape: f32[2,4,256], index: 10, kind: output, shape index: {}]
  %s11 = sld [smem:[#allocation0]]
  $region77: #{tpu_custom_call.1} parent=0
    _
  %s13 = ssub.s32 1, %s11
  %s14 = scalar_select 0, %s13, %s11
  $region1: #{tpu_custom_call.1} parent=0
    #allocation4 [shape = 'u8[8192]{0}', space=vmem, size = 0x2000, scoped, tag = 'input window, operand 0']
    #allocation5 [shape = 's32[2]{0}', space=sflag, size = 0x8, scoped, tag = 'scoped memory for tpu_custom_call.1']
    #allocation6 [shape = 's32[2]{0}', space=sflag, size = 0x8, scoped, tag = 'scoped memory for tpu_custom_call.1']
    #allocation7 [shape = 'u8[8192]{0}', space=vmem, size = 0x2000, scoped, tag = 'output window, operand 0']
    %15 = vsyncpa [#allocation5], 0
    %s16 = scalar_lea.sflag [#allocation5], 1
    %17 = vsyncpa %s16, 0
    %18 = vsyncpa [#allocation6], 0
    %s19 = scalar_lea.sflag [#allocation6], 1
    %20 = vsyncpa %s19, 0
    loop: start=0, step=1, limit=4
    $region2: #{tpu_custom_call.1} parent=1 // loop_pre_header
      _
    $region3: #{tpu_custom_call.1} parent=1 // loop_header
      %s22 = sphi 0, %s26
      %p23 = scmp.ge.s32.totalorder %s22, 4
      %s32 = sphi 0, %s34
      %s35 = sphi 0, %s32
      %s36 = sphi 0, %s35
      %s52 = sphi 0, %s36
      %s56 = sphi 0, %s56
      %s58 = sphi 0, %s56
      %s59 = sphi 0, %s58
      %s73 = sphi 0, %s59
      %s77 = sphi 0, %s77
      %s79 = sphi 0, %s77
      %s80 = sphi 0, %s79
      %s94 = sphi 0, %s80
      %s98 = sphi 0, %s98
      %s100 = sphi 0, %s98
      %s101 = sphi 0, %s100
      %s115 = sphi 0, %s101
      %s119 = sphi 0, %s119
      %s121 = sphi 0, %s119
      %s122 = sphi 0, %s121
      %s136 = sphi 0, %s122
      %s140 = sphi 0, %s140
      %s142 = sphi 0, %s140
      %s143 = sphi 0, %s142
      %s157 = sphi 0, %s143
      %s161 = sphi 0, %s161
      %s163 = sphi 0, %s161
      %s164 = sphi 0, %s163
      %s178 = sphi 0, %s164
      %s182 = sphi 0, %s182
      %s184 = sphi 0, %s182
      %s185 = sphi 0, %s184
      %s199 = sphi 0, %s185
      %s203 = sphi 0, %s203
      %s205 = sphi 0, %s203
      %s206 = sphi 0, %s205
      %s220 = sphi 0, %s206
      %s224 = sphi 0, %s224
      %s226 = sphi 0, %s224
      %s227 = sphi 0, %s226
      %s241 = sphi 0, %s227
      %s247 = sphi 0, %s249
      %s250 = sphi 0, %s247
      %s251 = sphi 0, %s250
      %s267 = sphi 0, %s251
    $region4: #{tpu_custom_call.1} parent=1 // loop_header_branch
      %25 = sbr.rel (%p23) target = $region8
    $region5: #{tpu_custom_call.1} parent=1 // loop_body
      %s27 = ssub.s32 %s22, 1
      %s28 = ssub.s32 %s22, 2
      %s29 = sadd.s32 %s22, 1
      %s30 = ssub.s32 %s22, %s29
      %p31 = scmp.eq.s32.totalorder %s30, 0
      %s33 = sadd.s32 %s32, 1
      %s34 = scalar_select %p31, %s32, %s33
      %p37 = pneg %p31
      %p38 = scmp.eq.s32.totalorder %s22, 1
      %p39 = por %p37, %p38
      %p40 = scmp.ne.s32.totalorder %s32, %s35
      %p41 = scmp.eq.s32.totalorder %s22, 0
      %p42 = por %p40, %p41
      %p43 = scmp.ne.s32.totalorder %s32, %s35
      %p44 = scmp.eq.s32.totalorder %s27, 1
      %p45 = por %p43, %p44
      %p46 = scmp.ne.s32.totalorder %s35, %s36
      %p47 = scmp.eq.s32.totalorder %s27, 0
      %p48 = por %p46, %p47
      %p49 = scmp.ne.s32.totalorder %s35, %s36
      %p50 = scmp.eq.s32.totalorder %s28, 1
      %p51 = por %p49, %p50
      %p53 = scmp.ne.s32.totalorder %s36, %s52
      %p54 = scmp.eq.s32.totalorder %s28, 0
      %p55 = por %p53, %p54
      %s57 = sadd.s32 %s56, 1
      %p60 = scmp.eq.s32.totalorder %s22, 1
      %p61 = scmp.ne.s32.totalorder %s56, %s58
      %p62 = scmp.eq.s32.totalorder %s22, 0
      %p63 = por %p61, %p62
      %p64 = scmp.ne.s32.totalorder %s56, %s58
      %p65 = scmp.eq.s32.totalorder %s27, 1
      %p66 = por %p64, %p65
      %p67 = scmp.ne.s32.totalorder %s58, %s59
      %p68 = scmp.eq.s32.totalorder %s27, 0
      %p69 = por %p67, %p68
      %p70 = scmp.ne.s32.totalorder %s58, %s59
      %p71 = scmp.eq.s32.totalorder %s28, 1
      %p72 = por %p70, %p71
      %p74 = scmp.ne.s32.totalorder %s59, %s73
      %p75 = scmp.eq.s32.totalorder %s28, 0
      %p76 = por %p74, %p75
      %s78 = sadd.s32 %s77, 1
      %p81 = scmp.eq.s32.totalorder %s22, 1
      %p82 = scmp.ne.s32.totalorder %s77, %s79
      %p83 = scmp.eq.s32.totalorder %s22, 0
      %p84 = por %p82, %p83
      %p85 = scmp.ne.s32.totalorder %s77, %s79
      %p86 = scmp.eq.s32.totalorder %s27, 1
      %p87 = por %p85, %p86
      %p88 = scmp.ne.s32.totalorder %s79, %s80
      %p89 = scmp.eq.s32.totalorder %s27, 0
      %p90 = por %p88, %p89
      %p91 = scmp.ne.s32.totalorder %s79, %s80
      %p92 = scmp.eq.s32.totalorder %s28, 1
      %p93 = por %p91, %p92
      %p95 = scmp.ne.s32.totalorder %s80, %s94
      %p96 = scmp.eq.s32.totalorder %s28, 0
      %p97 = por %p95, %p96
      %s99 = sadd.s32 %s98, 1
      %p102 = scmp.eq.s32.totalorder %s22, 1
      %p103 = scmp.ne.s32.totalorder %s98, %s100
      %p104 = scmp.eq.s32.totalorder %s22, 0
      %p105 = por %p103, %p104
      %p106 = scmp.ne.s32.totalorder %s98, %s100
      %p107 = scmp.eq.s32.totalorder %s27, 1
      %p108 = por %p106, %p107
      %p109 = scmp.ne.s32.totalorder %s100, %s101
      %p110 = scmp.eq.s32.totalorder %s27, 0
      %p111 = por %p109, %p110
      %p112 = scmp.ne.s32.totalorder %s100, %s101
      %p113 = scmp.eq.s32.totalorder %s28, 1
      %p114 = por %p112, %p113
      %p116 = scmp.ne.s32.totalorder %s101, %s115
      %p117 = scmp.eq.s32.totalorder %s28, 0
      %p118 = por %p116, %p117
      %s120 = sadd.s32 %s119, 1
      %p123 = scmp.eq.s32.totalorder %s22, 1
      %p124 = scmp.ne.s32.totalorder %s119, %s121
      %p125 = scmp.eq.s32.totalorder %s22, 0
      %p126 = por %p124, %p125
      %p127 = scmp.ne.s32.totalorder %s119, %s121
      %p128 = scmp.eq.s32.totalorder %s27, 1
      %p129 = por %p127, %p128
      %p130 = scmp.ne.s32.totalorder %s121, %s122
      %p131 = scmp.eq.s32.totalorder %s27, 0
      %p132 = por %p130, %p131
      %p133 = scmp.ne.s32.totalorder %s121, %s122
      %p134 = scmp.eq.s32.totalorder %s28, 1
      %p135 = por %p133, %p134
      %p137 = scmp.ne.s32.totalorder %s122, %s136
      %p138 = scmp.eq.s32.totalorder %s28, 0
      %p139 = por %p137, %p138
      %s141 = sadd.s32 %s140, 1
      %p144 = scmp.eq.s32.totalorder %s22, 1
      %p145 = scmp.ne.s32.totalorder %s140, %s142
      %p146 = scmp.eq.s32.totalorder %s22, 0
      %p147 = por %p145, %p146
      %p148 = scmp.ne.s32.totalorder %s140, %s142
      %p149 = scmp.eq.s32.totalorder %s27, 1
      %p150 = por %p148, %p149
      %p151 = scmp.ne.s32.totalorder %s142, %s143
      %p152 = scmp.eq.s32.totalorder %s27, 0
      %p153 = por %p151, %p152
      %p154 = scmp.ne.s32.totalorder %s142, %s143
      %p155 = scmp.eq.s32.totalorder %s28, 1
      %p156 = por %p154, %p155
      %p158 = scmp.ne.s32.totalorder %s143, %s157
      %p159 = scmp.eq.s32.totalorder %s28, 0
      %p160 = por %p158, %p159
      %s162 = sadd.s32 %s161, 1
      %p165 = scmp.eq.s32.totalorder %s22, 1
      %p166 = scmp.ne.s32.totalorder %s161, %s163
      %p167 = scmp.eq.s32.totalorder %s22, 0
      %p168 = por %p166, %p167
      %p169 = scmp.ne.s32.totalorder %s161, %s163
      %p170 = scmp.eq.s32.totalorder %s27, 1
      %p171 = por %p169, %p170
      %p172 = scmp.ne.s32.totalorder %s163, %s164
      %p173 = scmp.eq.s32.totalorder %s27, 0
      %p174 = por %p172, %p173
      %p175 = scmp.ne.s32.totalorder %s163, %s164
      %p176 = scmp.eq.s32.totalorder %s28, 1
      %p177 = por %p175, %p176
      %p179 = scmp.ne.s32.totalorder %s164, %s178
      %p180 = scmp.eq.s32.totalorder %s28, 0
      %p181 = por %p179, %p180
      %s183 = sadd.s32 %s182, 1
      %p186 = scmp.eq.s32.totalorder %s22, 1
      %p187 = scmp.ne.s32.totalorder %s182, %s184
      %p188 = scmp.eq.s32.totalorder %s22, 0
      %p189 = por %p187, %p188
      %p190 = scmp.ne.s32.totalorder %s182, %s184
      %p191 = scmp.eq.s32.totalorder %s27, 1
      %p192 = por %p190, %p191
      %p193 = scmp.ne.s32.totalorder %s184, %s185
      %p194 = scmp.eq.s32.totalorder %s27, 0
      %p195 = por %p193, %p194
      %p196 = scmp.ne.s32.totalorder %s184, %s185
      %p197 = scmp.eq.s32.totalorder %s28, 1
      %p198 = por %p196, %p197
      %p200 = scmp.ne.s32.totalorder %s185, %s199
      %p201 = scmp.eq.s32.totalorder %s28, 0
      %p202 = por %p200, %p201
      %s204 = sadd.s32 %s203, 1
      %p207 = scmp.eq.s32.totalorder %s22, 1
      %p208 = scmp.ne.s32.totalorder %s203, %s205
      %p209 = scmp.eq.s32.totalorder %s22, 0
      %p210 = por %p208, %p209
      %p211 = scmp.ne.s32.totalorder %s203, %s205
      %p212 = scmp.eq.s32.totalorder %s27, 1
      %p213 = por %p211, %p212
      %p214 = scmp.ne.s32.totalorder %s205, %s206
      %p215 = scmp.eq.s32.totalorder %s27, 0
      %p216 = por %p214, %p215
      %p217 = scmp.ne.s32.totalorder %s205, %s206
      %p218 = scmp.eq.s32.totalorder %s28, 1
      %p219 = por %p217, %p218
      %p221 = scmp.ne.s32.totalorder %s206, %s220
      %p222 = scmp.eq.s32.totalorder %s28, 0
      %p223 = por %p221, %p222
      %s225 = sadd.s32 %s224, 1
      %p228 = scmp.eq.s32.totalorder %s22, 1
      %p229 = scmp.ne.s32.totalorder %s224, %s226
      %p230 = scmp.eq.s32.totalorder %s22, 0
      %p231 = por %p229, %p230
      %p232 = scmp.ne.s32.totalorder %s224, %s226
      %p233 = scmp.eq.s32.totalorder %s27, 1
      %p234 = por %p232, %p233
      %p235 = scmp.ne.s32.totalorder %s226, %s227
      %p236 = scmp.eq.s32.totalorder %s27, 0
      %p237 = por %p235, %p236
      %p238 = scmp.ne.s32.totalorder %s226, %s227
      %p239 = scmp.eq.s32.totalorder %s28, 1
      %p240 = por %p238, %p239
      %p242 = scmp.ne.s32.totalorder %s227, %s241
      %p243 = scmp.eq.s32.totalorder %s28, 0
      %p244 = por %p242, %p243
      %s245 = ssub.s32 %s22, %s29
      %p246 = scmp.eq.s32.totalorder %s245, 0
      %s248 = sadd.s32 %s247, 1
      %s249 = scalar_select %p246, %s247, %s248
      %p252 = pneg %p246
      %p253 = scmp.eq.s32.totalorder %s22, 1
      %p254 = por %p252, %p253
      %p255 = scmp.ne.s32.totalorder %s247, %s250
      %p256 = scmp.eq.s32.totalorder %s22, 0
      %p257 = por %p255, %p256
      %p258 = scmp.ne.s32.totalorder %s247, %s250
      %p259 = scmp.eq.s32.totalorder %s27, 1
      %p260 = por %p258, %p259
      %p261 = scmp.ne.s32.totalorder %s250, %s251
      %p262 = scmp.eq.s32.totalorder %s27, 0
      %p263 = por %p261, %p262
      %p264 = scmp.ne.s32.totalorder %s250, %s251
      %p265 = scmp.eq.s32.totalorder %s28, 1
      %p266 = por %p264, %p265
      %p268 = scmp.ne.s32.totalorder %s251, %s267
      %p269 = scmp.eq.s32.totalorder %s28, 0
      %p270 = por %p268, %p269
      %p271 = scmp.le.s32.totalorder 1, %s22
      %p272 = scmp.lt.s32.totalorder %s22, 3
      %p273 = pnand %p271, %p272
      %p274 = pneg %p273
      // Predicated region
      $region9: #{tpu_custom_call.1} parent=5 // pred_check
        _
      $region10: #{tpu_custom_call.1} parent=5 // pred_check_branch
        %276 = sbr.rel (%p273) target = $region12
      $region11: #{tpu_custom_call.1} parent=5 // pred_region
        %s277 = ssub.s32 %s22, 1
        // Predicated region
        $region13: #{tpu_custom_call.1} parent=11 // pred_check
          %p278 = pneg %p69
        $region14: #{tpu_custom_call.1} parent=11 // pred_check_branch
          %280 = sbr.rel (%p278) target = $region16
        $region15: #{tpu_custom_call.1} parent=11 // pred_region
          _
        $region16: #{tpu_custom_call.1} parent=11 // pred_fallthru
          _
        // Predicated region
        $region17: #{tpu_custom_call.1} parent=11 // pred_check
          %p281 = pneg %p90
        $region18: #{tpu_custom_call.1} parent=11 // pred_check_branch
          %283 = sbr.rel (%p281) target = $region20
        $region19: #{tpu_custom_call.1} parent=11 // pred_region
          _
        $region20: #{tpu_custom_call.1} parent=11 // pred_fallthru
          _
        // Predicated region
        $region21: #{tpu_custom_call.1} parent=11 // pred_check
          %p284 = pneg %p111
        $region22: #{tpu_custom_call.1} parent=11 // pred_check_branch
          %286 = sbr.rel (%p284) target = $region24
        $region23: #{tpu_custom_call.1} parent=11 // pred_region
          _
        $region24: #{tpu_custom_call.1} parent=11 // pred_fallthru
          _
        // Predicated region
        $region25: #{tpu_custom_call.1} parent=11 // pred_check
          %p287 = pneg %p132
        $region26: #{tpu_custom_call.1} parent=11 // pred_check_branch
          %289 = sbr.rel (%p287) target = $region28
        $region27: #{tpu_custom_call.1} parent=11 // pred_region
          _
        $region28: #{tpu_custom_call.1} parent=11 // pred_fallthru
          _
        // Predicated region
        $region29: #{tpu_custom_call.1} parent=11 // pred_check
          %p290 = pneg %p153
        $region30: #{tpu_custom_call.1} parent=11 // pred_check_branch
          %292 = sbr.rel (%p290) target = $region32
        $region31: #{tpu_custom_call.1} parent=11 // pred_region
          _
        $region32: #{tpu_custom_call.1} parent=11 // pred_fallthru
          _
        // Predicated region
        $region33: #{tpu_custom_call.1} parent=11 // pred_check
          %p293 = pneg %p174
        $region34: #{tpu_custom_call.1} parent=11 // pred_check_branch
          %295 = sbr.rel (%p293) target = $region36
        $region35: #{tpu_custom_call.1} parent=11 // pred_region
          _
        $region36: #{tpu_custom_call.1} parent=11 // pred_fallthru
          _
        // Predicated region
        $region37: #{tpu_custom_call.1} parent=11 // pred_check
          %p296 = pneg %p195
        $region38: #{tpu_custom_call.1} parent=11 // pred_check_branch
          %298 = sbr.rel (%p296) target = $region40
        $region39: #{tpu_custom_call.1} parent=11 // pred_region
          _
        $region40: #{tpu_custom_call.1} parent=11 // pred_fallthru
          _
        // Predicated region
        $region41: #{tpu_custom_call.1} parent=11 // pred_check
          %p299 = pneg %p216
        $region42: #{tpu_custom_call.1} parent=11 // pred_check_branch
          %301 = sbr.rel (%p299) target = $region44
        $region43: #{tpu_custom_call.1} parent=11 // pred_region
          _
        $region44: #{tpu_custom_call.1} parent=11 // pred_fallthru
          _
        // Predicated region
        $region45: #{tpu_custom_call.1} parent=11 // pred_check
          %p302 = pneg %p237
        $region46: #{tpu_custom_call.1} parent=11 // pred_check_branch
          %304 = sbr.rel (%p302) target = $region48
        $region47: #{tpu_custom_call.1} parent=11 // pred_region
          _
        $region48: #{tpu_custom_call.1} parent=11 // pred_fallthru
          _
      $region12: #{tpu_custom_call.1} parent=5 // pred_fallthru
        _
      %p305 = scmp.lt.s32.totalorder %s22, 2
      // Predicated region
      $region49: #{tpu_custom_call.1} parent=5 // pred_check
        %p306 = pneg %p305
      $region50: #{tpu_custom_call.1} parent=5 // pred_check_branch
        %308 = sbr.rel (%p306) target = $region52
      $region51: #{tpu_custom_call.1} parent=5 // pred_region
        // Predicated region
        $region53: #{tpu_custom_call.1} parent=51 // pred_check
          %p309 = pneg %p42
        $region54: #{tpu_custom_call.1} parent=51 // pred_check_branch
          %311 = sbr.rel (%p309) target = $region56
        $region55: #{tpu_custom_call.1} parent=51 // pred_region
          %s312 = sand.u32 %s32, 1
          %s313 = scalar_lea.sflag [#allocation5], %s312
          %s314 = sand.u32 %s32, 1
          %s315 = smul.addr %s314, 8
          %s316 = scalar_lea.vmem [#allocation4], %s315
          %s318 = ssub.s32 128, 128
          %319 = vsyncadd %s313, %s318
          %s320 = smul.addr %s22, 2
          %s321 = smul.addr %s320, 64
          %s322 = scalar_lea.hbm %s0, %s321
          %s324 = sshll.u32 %s316, 4
          %s325 = int_to_ptr.vmem [resolvable:$true] %s324
          %327 = dma.hbm_to_vmem [thread:$0]  %s322, 128, %s325, %s313
        $region56: #{tpu_custom_call.1} parent=51 // pred_fallthru
          _
      $region52: #{tpu_custom_call.1} parent=5 // pred_fallthru
        _
      %p328 = scmp.le.s32.totalorder 1, %s22
      %p329 = scmp.lt.s32.totalorder %s22, 3
      %p330 = pnand %p328, %p329
      %p331 = pneg %p330
      // Predicated region
      $region57: #{tpu_custom_call.1} parent=5 // pred_check
        _
      $region58: #{tpu_custom_call.1} parent=5 // pred_check_branch
        %333 = sbr.rel (%p330) target = $region60
      $region59: #{tpu_custom_call.1} parent=5 // pred_region
        %s334 = ssub.s32 %s22, 1
        %s335 = sand.u32 %s35, 1
        %s336 = scalar_lea.sflag [#allocation5], %s335
        %s337 = sand.u32 %s35, 1
        %s338 = smul.addr %s337, 8
        %s339 = scalar_lea.vmem [#allocation4], %s338
        // Predicated region
        $region61: #{tpu_custom_call.1} parent=59 // pred_check
          %p340 = pneg %p48
        $region62: #{tpu_custom_call.1} parent=59 // pred_check_branch
          %342 = sbr.rel (%p340) target = $region64
        $region63: #{tpu_custom_call.1} parent=59 // pred_region
          %343 = dma.done %s336, 128
        $region64: #{tpu_custom_call.1} parent=59 // pred_fallthru
          _
        %s344 = sand.u32 %s35, 1
        %s345 = scalar_lea.sflag [#allocation5], %s344
        %s346 = sand.u32 %s35, 1
        %s347 = smul.addr %s346, 8
        %s348 = scalar_lea.vmem [#allocation4], %s347
        %p349 = pneg %p48
        %p350 = pneg %p45
        %p351 = pneg %p69
        %p352 = pneg %p66
        %p353 = pneg %p90
        %p354 = pneg %p87
        %p355 = pneg %p111
        %p356 = pneg %p108
        %p357 = pneg %p132
        %p358 = pneg %p129
        %p359 = pneg %p153
        %p360 = pneg %p150
        %p361 = pneg %p174
        %p362 = pneg %p171
        %p363 = pneg %p195
        %p364 = pneg %p192
        %p365 = pneg %p216
        %p366 = pneg %p213
        %p367 = pneg %p237
        %p368 = pneg %p234
        %p369 = pneg %p263
        %p370 = pneg %p260
        %s371 = sand.u32 %s250, 1
        %s372 = scalar_lea.sflag [#allocation6], %s371
        %s373 = sand.u32 %s250, 1
        %s374 = smul.addr %s373, 8
        %s375 = scalar_lea.vmem [#allocation7], %s374
        %377 = vst [vmem:[#allocation2] sm:$0xff] 0.0
        %378 = vst [vmem:[#allocation2 + $0x8] sm:$0xff] 0.0
        %v379 = vld [vmem:[%s339] sm:$0xff]
        %v381 = vcombine.high %v379, %v379
        %383 = vst [vmem:[#allocation2] sm:$0xf] %v379
        %384 = vst [vmem:[#allocation2 + $0x8] sm:$0xf] %v381
        %v385 = vld [vmem:[#allocation2] sm:$0xff]
        %v386 = vld [vmem:[#allocation2 + $0x8] sm:$0xff]
        %v387 = vld [vmem:[%s1] sm:$0xff]
        %v388 = vld [vmem:[%s1 + $0x8] sm:$0xff]
        %v389 = vld [vmem:[%s1 + $0x10] sm:$0xff]
        %v390 = vld [vmem:[%s1 + $0x18] sm:$0xff]
        %391 = vrot.lane.b32.xlu0 %v385, 17
        %v392 = vpop.permute.xlu0 %391
        %393 = vrot.lane.b32.xlu0 %v386, 17
        %v394 = vpop.permute.xlu0 %393
        %v395 = vlaneseq
        %v396 = vand.u32 %v395, 127
        %vm397 = vcmp.lt.s32.totalorder %v396, 17
        %v398 = vsel %vm397, %v392, %v394
        %v399 = vsel %vm397, %v394, %v392
        %v400 = vlaneseq
        %v401 = vshrl.u32 %v400, 7
        %v402 = vsub.s32 0, %v401
        %v403 = vrot.slane %v387, %v402
        %v404 = vlaneseq
        %v405 = vshrl.u32 %v404, 7
        %v406 = vsub.s32 0, %v405
        %v407 = vrot.slane %v388, %v406
        %v408 = vmul.f32 %v399, %v403
        %v409 = vmul.f32 %v398, %v407
        %410 = vst [vmem:[#allocation3] sm:$0xff] %v408
        %411 = vst [vmem:[#allocation3 + $0x8] sm:$0xff] %v409
        %412 = vrot.lane.b32.xlu0 %v385, 16
        %v413 = vpop.permute.xlu0 %412
        %414 = vrot.lane.b32.xlu0 %v386, 16
        %v415 = vpop.permute.xlu0 %414
        %vm416 = vcmp.lt.s32.totalorder %v396, 16
        %v417 = vsel %vm416, %v413, %v415
        %v418 = vsel %vm416, %v415, %v413
        %v419 = vlaneseq
        %v420 = vshrl.u32 %v419, 7
        %v421 = vsub.s32 1, %v420
        %v422 = vrot.slane %v387, %v421
        %v423 = vlaneseq
        %v424 = vshrl.u32 %v423, 7
        %v425 = vsub.s32 1, %v424
        %v426 = vrot.slane %v388, %v425
        %v427 = vmul.f32 %v418, %v422
        %v428 = vmul.f32 %v417, %v426
        %429 = vst [vmem:[#allocation3 + $0x10] sm:$0xff] %v427
        %430 = vst [vmem:[#allocation3 + $0x18] sm:$0xff] %v428
        %431 = vrot.lane.b32.xlu0 %v385, 15
        %v432 = vpop.permute.xlu0 %431
        %433 = vrot.lane.b32.xlu0 %v386, 15
        %v434 = vpop.permute.xlu0 %433
        %vm435 = vcmp.lt.s32.totalorder %v396, 15
        %v436 = vsel %vm435, %v432, %v434
        %v437 = vsel %vm435, %v434, %v432
        %v438 = vlaneseq
        %v439 = vshrl.u32 %v438, 7
        %v440 = vsub.s32 2, %v439
        %v441 = vrot.slane %v387, %v440
        %v442 = vlaneseq
        %v443 = vshrl.u32 %v442, 7
        %v444 = vsub.s32 2, %v443
        %v445 = vrot.slane %v388, %v444
        %v446 = vmul.f32 %v437, %v441
        %v447 = vmul.f32 %v436, %v445
        %448 = vst [vmem:[#allocation3 + $0x20] sm:$0xff] %v446
        %449 = vst [vmem:[#allocation3 + $0x28] sm:$0xff] %v447
        %450 = vrot.lane.b32.xlu0 %v385, 1
        %v451 = vpop.permute.xlu0 %450
        %452 = vrot.lane.b32.xlu0 %v386, 1
        %v453 = vpop.permute.xlu0 %452
        %vm454 = vcmp.lt.s32.totalorder %v396, 1
        %v455 = vsel %vm454, %v451, %v453
        %v456 = vsel %vm454, %v453, %v451
        %v457 = vlaneseq
        %v458 = vshrl.u32 %v457, 7
        %v459 = vsub.s32 3, %v458
        %v460 = vrot.slane %v387, %v459
        %v461 = vlaneseq
        %v462 = vshrl.u32 %v461, 7
        %v463 = vsub.s32 3, %v462
        %v464 = vrot.slane %v388, %v463
        %v465 = vmul.f32 %v456, %v460
        %v466 = vmul.f32 %v455, %v464
        %467 = vst [vmem:[#allocation3 + $0x30] sm:$0xff] %v465
        %468 = vst [vmem:[#allocation3 + $0x38] sm:$0xff] %v466
        %469 = vst [vmem:[#allocation3 + $0x40] sm:$0xff] %v385
        %470 = vst [vmem:[#allocation3 + $0x48] sm:$0xff] %v386
        %471 = vrot.lane.b32.xlu0 %v385, 127
        %v472 = vpop.permute.xlu0 %471
        %473 = vrot.lane.b32.xlu0 %v386, 127
        %v474 = vpop.permute.xlu0 %473
        %vm475 = vcmp.lt.s32.totalorder %v396, 127
        %v476 = vsel %vm475, %v472, %v474
        %v477 = vsel %vm475, %v474, %v472
        %v478 = vlaneseq
        %v479 = vshrl.u32 %v478, 7
        %v480 = vsub.s32 5, %v479
        %v481 = vrot.slane %v387, %v480
        %v482 = vlaneseq
        %v483 = vshrl.u32 %v482, 7
        %v484 = vsub.s32 5, %v483
        %v485 = vrot.slane %v388, %v484
        %v486 = vmul.f32 %v476, %v481
        %v487 = vmul.f32 %v477, %v485
        %488 = vst [vmem:[#allocation3 + $0x50] sm:$0xff] %v486
        %489 = vst [vmem:[#allocation3 + $0x58] sm:$0xff] %v487
        %490 = vrot.lane.b32.xlu0 %v385, 113
        %v491 = vpop.permute.xlu0 %490
        %492 = vrot.lane.b32.xlu0 %v386, 113
        %v493 = vpop.permute.xlu0 %492
        %vm494 = vcmp.lt.s32.totalorder %v396, 113
        %v495 = vsel %vm494, %v491, %v493
        %v496 = vsel %vm494, %v493, %v491
        %v497 = vlaneseq
        %v498 = vshrl.u32 %v497, 7
        %v499 = vsub.s32 6, %v498
        %v500 = vrot.slane %v387, %v499
        %v501 = vlaneseq
        %v502 = vshrl.u32 %v501, 7
        %v503 = vsub.s32 6, %v502
        %v504 = vrot.slane %v388, %v503
        %v505 = vmul.f32 %v495, %v500
        %v506 = vmul.f32 %v496, %v504
        %507 = vst [vmem:[#allocation3 + $0x60] sm:$0xff] %v505
        %508 = vst [vmem:[#allocation3 + $0x68] sm:$0xff] %v506
        %509 = vrot.lane.b32.xlu0 %v385, 112
        %v510 = vpop.permute.xlu0 %509
        %511 = vrot.lane.b32.xlu0 %v386, 112
        %v512 = vpop.permute.xlu0 %511
        %vm513 = vcmp.lt.s32.totalorder %v396, 112
        %v514 = vsel %vm513, %v510, %v512
        %v515 = vsel %vm513, %v512, %v510
        %v516 = vlaneseq
        %v517 = vshrl.u32 %v516, 7
        %v518 = vsub.s32 7, %v517
        %v519 = vrot.slane %v387, %v518
        %v520 = vlaneseq
        %v521 = vshrl.u32 %v520, 7
        %v522 = vsub.s32 7, %v521
        %v523 = vrot.slane %v388, %v522
        %v524 = vmul.f32 %v514, %v519
        %v525 = vmul.f32 %v515, %v523
        %526 = vst [vmem:[#allocation3 + $0x70] sm:$0xff] %v524
        %527 = vst [vmem:[#allocation3 + $0x78] sm:$0xff] %v525
        %528 = vrot.lane.b32.xlu0 %v385, 111
        %v529 = vpop.permute.xlu0 %528
        %530 = vrot.lane.b32.xlu0 %v386, 111
        %v531 = vpop.permute.xlu0 %530
        %vm532 = vcmp.lt.s32.totalorder %v396, 111
        %v533 = vsel %vm532, %v529, %v531
        %v534 = vsel %vm532, %v531, %v529
        %v535 = vlaneseq
        %v536 = vshrl.u32 %v535, 7
        %v537 = vsub.s32 0, %v536
        %v538 = vrot.slane %v389, %v537
        %v539 = vlaneseq
        %v540 = vshrl.u32 %v539, 7
        %v541 = vsub.s32 0, %v540
        %v542 = vrot.slane %v390, %v541
        %v543 = vmul.f32 %v533, %v538
        %v544 = vmul.f32 %v534, %v542
        %545 = vst [vmem:[#allocation3 + $0x80] sm:$0xff] %v543
        %546 = vst [vmem:[#allocation3 + $0x88] sm:$0xff] %v544
        %v547 = vld [vmem:[#allocation3] sm:$0xff]
        %v548 = vld [vmem:[#allocation3 + $0x8] sm:$0xff]
        %v549 = vld [vmem:[#allocation3 + $0x10] sm:$0xff]
        %v550 = vld [vmem:[#allocation3 + $0x18] sm:$0xff]
        %v551 = vld [vmem:[#allocation3 + $0x20] sm:$0xff]
        %v552 = vld [vmem:[#allocation3 + $0x28] sm:$0xff]
        %v553 = vld [vmem:[#allocation3 + $0x30] sm:$0xff]
        %v554 = vld [vmem:[#allocation3 + $0x38] sm:$0xff]
        %v555 = vld [vmem:[#allocation3 + $0x40] sm:$0xff]
        %v556 = vld [vmem:[#allocation3 + $0x48] sm:$0xff]
        %v557 = vld [vmem:[#allocation3 + $0x50] sm:$0xff]
        %v558 = vld [vmem:[#allocation3 + $0x58] sm:$0xff]
        %v559 = vld [vmem:[#allocation3 + $0x60] sm:$0xff]
        %v560 = vld [vmem:[#allocation3 + $0x68] sm:$0xff]
        %v561 = vld [vmem:[#allocation3 + $0x70] sm:$0xff]
        %v562 = vld [vmem:[#allocation3 + $0x78] sm:$0xff]
        %v563 = vld [vmem:[#allocation3 + $0x80] sm:$0xff]
        %v564 = vld [vmem:[#allocation3 + $0x88] sm:$0xff]
        %v565 = vpack.c.bf16 %v549, %v547
        %v566 = vpack.c.bf16 %v550, %v548
        %v567 = vpack.c.bf16 %v553, %v551
        %v568 = vpack.c.bf16 %v554, %v552
        %v569 = vpack.c.bf16 %v557, %v555
        %v570 = vpack.c.bf16 %v558, %v556
        %v571 = vpack.c.bf16 %v561, %v559
        %v572 = vpack.c.bf16 %v562, %v560
        %v573 = vpack.c.bf16 %v563, %v563
        %v574 = vpack.c.bf16 %v564, %v564
        %v575 = vld [vmem:[%s2] sm:$0xf]
        %v576 = vld [vmem:[%s3] sm:$0xff]
        %578 = vset.pattern.permute.xlu0 0
        %579 = vperm.xlu0 %578, %v576
        %v580 = vpop.permute.xlu0 %579
        %vm582 = vcmask 588800
        %v584 = vsel %vm582, %v575, 0
        %vm586 = vcmask 1043456
        %v588 = vsel %vm586, %v573, 0
        %v591 = vsel %vm586, %v574, 0
        %593 = vmatprep.subr.bf16.mxu0 0
        %594 = vmatpush1.bf16.msra.mxu0 0
        %595 = vmatprep.subr.bf16.mxu0 0
        %596 = vmatpush1.bf16.msra.mxu0 0
        %597 = vmatprep.subr.bf16.mxu0 0
        %598 = vmatpush1.bf16.msra.mxu0 0
        %599 = vmatprep.subr.bf16.mxu0 %v591
        %600 = vmatpush1.bf16.msra.mxu0 %v588
        %601 = vmatprep.subr.bf16.mxu0 %v572
        %602 = vmatpush1.bf16.msra.mxu0 %v571
        %603 = vmatprep.subr.bf16.mxu0 %v570
        %604 = vmatpush1.bf16.msra.mxu0 %v569
        %605 = vmatprep.subr.bf16.mxu0 %v568
        %606 = vmatpush1.bf16.msra.mxu0 %v567
        %607 = vmatprep.subr.bf16.mxu0 %v566
        %608 = vmatpush1.bf16.msra.mxu0 %v565
        %609 = vmatprep.subr.bf16.mxu0 0
        %610 = vmatpush2.bf16.msra.mxu0 0
        %611 = vmatprep.subr.bf16.mxu0 0
        %612 = vmatpush2.bf16.msra.mxu0 0
        %613 = vmatprep.subr.bf16.mxu0 0
        %614 = vmatpush2.bf16.msra.mxu0 0
        %615 = vmatprep.subr.bf16.mxu0 0
        %616 = vmatpush2.bf16.msra.mxu0 0
        %617 = vmatprep.subr.bf16.mxu0 0
        %618 = vmatpush2.bf16.msra.mxu0 0
        %619 = vmatprep.subr.bf16.mxu0 0
        %620 = vmatpush2.bf16.msra.mxu0 0
        %621 = vmatprep.subr.bf16.mxu0 0
        %622 = vmatpush2.bf16.msra.mxu0 0
        %623 = vmatprep.subr.bf16.mxu0 0
        %624 = vmatpush2.bf16.msra.mxu0 0
        %625 = vmatprep.mubr.bf16.mxu0 0
        %626 = vmatmul.mubr.bf16.gmra.mxu0 %v584
        %v627 = vpop.f32.mrf.mxu0
        %v628 = vadd.f32 %v580, %v627
        %v629 = vpop.f32.mrf.mxu0
        %v630 = vadd.f32 %v580, %v629
        %v631 = vpop.f32.mrf.mxu0
        %v632 = vpop.f32.mrf.mxu0
        %633 = vdwg.mxu0
        %v634 = vmax.f32 %v628, 0.0
        %v635 = vmax.f32 %v630, 0.0
        %636 = vrot.lane.b32.xlu0 %v634, 17
        %v637 = vpop.permute.xlu0 %636
        %638 = vrot.lane.b32.xlu0 %v635, 17
        %v639 = vpop.permute.xlu0 %638
        %v640 = vsel %vm397, %v637, %v639
        %v641 = vsel %vm397, %v639, %v637
        %v642 = vmul.f32 %v641, %v403
        %v643 = vmul.f32 %v640, %v407
        %644 = vst [vmem:[#allocation3] sm:$0xff] %v642
        %645 = vst [vmem:[#allocation3 + $0x8] sm:$0xff] %v643
        %646 = vrot.lane.b32.xlu0 %v634, 16
        %v647 = vpop.permute.xlu0 %646
        %648 = vrot.lane.b32.xlu0 %v635, 16
        %v649 = vpop.permute.xlu0 %648
        %v650 = vsel %vm416, %v647, %v649
        %v651 = vsel %vm416, %v649, %v647
        %v652 = vmul.f32 %v651, %v422
        %v653 = vmul.f32 %v650, %v426
        %654 = vst [vmem:[#allocation3 + $0x10] sm:$0xff] %v652
        %655 = vst [vmem:[#allocation3 + $0x18] sm:$0xff] %v653
        %656 = vrot.lane.b32.xlu0 %v634, 15
        %v657 = vpop.permute.xlu0 %656
        %658 = vrot.lane.b32.xlu0 %v635, 15
        %v659 = vpop.permute.xlu0 %658
        %v660 = vsel %vm435, %v657, %v659
        %v661 = vsel %vm435, %v659, %v657
        %v662 = vmul.f32 %v661, %v441
        %v663 = vmul.f32 %v660, %v445
        %664 = vst [vmem:[#allocation3 + $0x20] sm:$0xff] %v662
        %665 = vst [vmem:[#allocation3 + $0x28] sm:$0xff] %v663
        %666 = vrot.lane.b32.xlu0 %v634, 1
        %v667 = vpop.permute.xlu0 %666
        %668 = vrot.lane.b32.xlu0 %v635, 1
        %v669 = vpop.permute.xlu0 %668
        %v670 = vsel %vm454, %v667, %v669
        %v671 = vsel %vm454, %v669, %v667
        %v672 = vmul.f32 %v671, %v460
        %v673 = vmul.f32 %v670, %v464
        %674 = vst [vmem:[#allocation3 + $0x30] sm:$0xff] %v672
        %675 = vst [vmem:[#allocation3 + $0x38] sm:$0xff] %v673
        %676 = vst [vmem:[#allocation3 + $0x40] sm:$0xff] %v634
        %677 = vst [vmem:[#allocation3 + $0x48] sm:$0xff] %v635
        %678 = vrot.lane.b32.xlu0 %v634, 127
        %v679 = vpop.permute.xlu0 %678
        %680 = vrot.lane.b32.xlu0 %v635, 127
        %v681 = vpop.permute.xlu0 %680
        %v682 = vsel %vm475, %v679, %v681
        %v683 = vsel %vm475, %v681, %v679
        %v684 = vmul.f32 %v682, %v481
        %v685 = vmul.f32 %v683, %v485
        %686 = vst [vmem:[#allocation3 + $0x50] sm:$0xff] %v684
        %687 = vst [vmem:[#allocation3 + $0x58] sm:$0xff] %v685
        %688 = vrot.lane.b32.xlu0 %v634, 113
        %v689 = vpop.permute.xlu0 %688
        %690 = vrot.lane.b32.xlu0 %v635, 113
        %v691 = vpop.permute.xlu0 %690
        %v692 = vsel %vm494, %v689, %v691
        %v693 = vsel %vm494, %v691, %v689
        %v694 = vmul.f32 %v692, %v500
        %v695 = vmul.f32 %v693, %v504
        %696 = vst [vmem:[#allocation3 + $0x60] sm:$0xff] %v694
        %697 = vst [vmem:[#allocation3 + $0x68] sm:$0xff] %v695
        %698 = vrot.lane.b32.xlu0 %v634, 112
        %v699 = vpop.permute.xlu0 %698
        %700 = vrot.lane.b32.xlu0 %v635, 112
        %v701 = vpop.permute.xlu0 %700
        %v702 = vsel %vm513, %v699, %v701
        %v703 = vsel %vm513, %v701, %v699
        %v704 = vmul.f32 %v702, %v519
        %v705 = vmul.f32 %v703, %v523
        %706 = vst [vmem:[#allocation3 + $0x70] sm:$0xff] %v704
        %707 = vst [vmem:[#allocation3 + $0x78] sm:$0xff] %v705
        %708 = vrot.lane.b32.xlu0 %v634, 111
        %v709 = vpop.permute.xlu0 %708
        %710 = vrot.lane.b32.xlu0 %v635, 111
        %v711 = vpop.permute.xlu0 %710
        %v712 = vsel %vm532, %v709, %v711
        %v713 = vsel %vm532, %v711, %v709
        %v714 = vmul.f32 %v712, %v538
        %v715 = vmul.f32 %v713, %v542
        %716 = vst [vmem:[#allocation3 + $0x80] sm:$0xff] %v714
        %717 = vst [vmem:[#allocation3 + $0x88] sm:$0xff] %v715
        %v718 = vld [vmem:[#allocation3] sm:$0xff]
        %v719 = vld [vmem:[#allocation3 + $0x8] sm:$0xff]
        %v720 = vld [vmem:[#allocation3 + $0x10] sm:$0xff]
        %v721 = vld [vmem:[#allocation3 + $0x18] sm:$0xff]
        %v722 = vld [vmem:[#allocation3 + $0x20] sm:$0xff]
        %v723 = vld [vmem:[#allocation3 + $0x28] sm:$0xff]
        %v724 = vld [vmem:[#allocation3 + $0x30] sm:$0xff]
        %v725 = vld [vmem:[#allocation3 + $0x38] sm:$0xff]
        %v726 = vld [vmem:[#allocation3 + $0x40] sm:$0xff]
        %v727 = vld [vmem:[#allocation3 + $0x48] sm:$0xff]
        %v728 = vld [vmem:[#allocation3 + $0x50] sm:$0xff]
        %v729 = vld [vmem:[#allocation3 + $0x58] sm:$0xff]
        %v730 = vld [vmem:[#allocation3 + $0x60] sm:$0xff]
        %v731 = vld [vmem:[#allocation3 + $0x68] sm:$0xff]
        %v732 = vld [vmem:[#allocation3 + $0x70] sm:$0xff]
        %v733 = vld [vmem:[#allocation3 + $0x78] sm:$0xff]
        %v734 = vld [vmem:[#allocation3 + $0x80] sm:$0xff]
        %v735 = vld [vmem:[#allocation3 + $0x88] sm:$0xff]
        %v736 = vpack.c.bf16 %v720, %v718
        %v737 = vpack.c.bf16 %v721, %v719
        %v738 = vpack.c.bf16 %v724, %v722
        %v739 = vpack.c.bf16 %v725, %v723
        %v740 = vpack.c.bf16 %v728, %v726
        %v741 = vpack.c.bf16 %v729, %v727
        %v742 = vpack.c.bf16 %v732, %v730
        %v743 = vpack.c.bf16 %v733, %v731
        %v744 = vpack.c.bf16 %v734, %v734
        %v745 = vpack.c.bf16 %v735, %v735
        %v746 = vld [vmem:[%s4] sm:$0xf]
        %v747 = vld [vmem:[%s5] sm:$0xff]
        %749 = vset.pattern.permute.xlu0 0
        %750 = vperm.xlu0 %749, %v747
        %v751 = vpop.permute.xlu0 %750
        %v754 = vsel %vm582, %v746, 0
        %v757 = vsel %vm586, %v744, 0
        %v760 = vsel %vm586, %v745, 0
        %762 = vmatprep.subr.bf16.mxu0 0
        %763 = vmatpush1.bf16.msra.mxu0 0
        %764 = vmatprep.subr.bf16.mxu0 0
        %765 = vmatpush1.bf16.msra.mxu0 0
        %766 = vmatprep.subr.bf16.mxu0 0
        %767 = vmatpush1.bf16.msra.mxu0 0
        %768 = vmatprep.subr.bf16.mxu0 %v760
        %769 = vmatpush1.bf16.msra.mxu0 %v757
        %770 = vmatprep.subr.bf16.mxu0 %v743
        %771 = vmatpush1.bf16.msra.mxu0 %v742
        %772 = vmatprep.subr.bf16.mxu0 %v741
        %773 = vmatpush1.bf16.msra.mxu0 %v740
        %774 = vmatprep.subr.bf16.mxu0 %v739
        %775 = vmatpush1.bf16.msra.mxu0 %v738
        %776 = vmatprep.subr.bf16.mxu0 %v737
        %777 = vmatpush1.bf16.msra.mxu0 %v736
        %778 = vmatprep.subr.bf16.mxu0 0
        %779 = vmatpush2.bf16.msra.mxu0 0
        %780 = vmatprep.subr.bf16.mxu0 0
        %781 = vmatpush2.bf16.msra.mxu0 0
        %782 = vmatprep.subr.bf16.mxu0 0
        %783 = vmatpush2.bf16.msra.mxu0 0
        %784 = vmatprep.subr.bf16.mxu0 0
        %785 = vmatpush2.bf16.msra.mxu0 0
        %786 = vmatprep.subr.bf16.mxu0 0
        %787 = vmatpush2.bf16.msra.mxu0 0
        %788 = vmatprep.subr.bf16.mxu0 0
        %789 = vmatpush2.bf16.msra.mxu0 0
        %790 = vmatprep.subr.bf16.mxu0 0
        %791 = vmatpush2.bf16.msra.mxu0 0
        %792 = vmatprep.subr.bf16.mxu0 0
        %793 = vmatpush2.bf16.msra.mxu0 0
        %794 = vmatprep.mubr.bf16.mxu0 0
        %795 = vmatmul.mubr.bf16.gmra.mxu0 %v754
        %v796 = vpop.f32.mrf.mxu0
        %v797 = vadd.f32 %v751, %v796
        %v798 = vpop.f32.mrf.mxu0
        %v799 = vadd.f32 %v751, %v798
        %v800 = vpop.f32.mrf.mxu0
        %v801 = vpop.f32.mrf.mxu0
        %802 = vdwg.mxu0
        %v803 = vmax.f32 %v797, 0.0
        %v804 = vmax.f32 %v799, 0.0
        %805 = vrot.lane.b32.xlu0 %v803, 17
        %v806 = vpop.permute.xlu0 %805
        %807 = vrot.lane.b32.xlu0 %v804, 17
        %v808 = vpop.permute.xlu0 %807
        %v809 = vsel %vm397, %v806, %v808
        %v810 = vsel %vm397, %v808, %v806
        %v811 = vmul.f32 %v810, %v403
        %v812 = vmul.f32 %v809, %v407
        %813 = vst [vmem:[#allocation3] sm:$0xff] %v811
        %814 = vst [vmem:[#allocation3 + $0x8] sm:$0xff] %v812
        %815 = vrot.lane.b32.xlu0 %v803, 16
        %v816 = vpop.permute.xlu0 %815
        %817 = vrot.lane.b32.xlu0 %v804, 16
        %v818 = vpop.permute.xlu0 %817
        %v819 = vsel %vm416, %v816, %v818
        %v820 = vsel %vm416, %v818, %v816
        %v821 = vmul.f32 %v820, %v422
        %v822 = vmul.f32 %v819, %v426
        %823 = vst [vmem:[#allocation3 + $0x10] sm:$0xff] %v821
        %824 = vst [vmem:[#allocation3 + $0x18] sm:$0xff] %v822
        %825 = vrot.lane.b32.xlu0 %v803, 15
        %v826 = vpop.permute.xlu0 %825
        %827 = vrot.lane.b32.xlu0 %v804, 15
        %v828 = vpop.permute.xlu0 %827
        %v829 = vsel %vm435, %v826, %v828
        %v830 = vsel %vm435, %v828, %v826
        %v831 = vmul.f32 %v830, %v441
        %v832 = vmul.f32 %v829, %v445
        %833 = vst [vmem:[#allocation3 + $0x20] sm:$0xff] %v831
        %834 = vst [vmem:[#allocation3 + $0x28] sm:$0xff] %v832
        %835 = vrot.lane.b32.xlu0 %v803, 1
        %v836 = vpop.permute.xlu0 %835
        %837 = vrot.lane.b32.xlu0 %v804, 1
        %v838 = vpop.permute.xlu0 %837
        %v839 = vsel %vm454, %v836, %v838
        %v840 = vsel %vm454, %v838, %v836
        %v841 = vmul.f32 %v840, %v460
        %v842 = vmul.f32 %v839, %v464
        %843 = vst [vmem:[#allocation3 + $0x30] sm:$0xff] %v841
        %844 = vst [vmem:[#allocation3 + $0x38] sm:$0xff] %v842
        %845 = vst [vmem:[#allocation3 + $0x40] sm:$0xff] %v803
        %846 = vst [vmem:[#allocation3 + $0x48] sm:$0xff] %v804
        %847 = vrot.lane.b32.xlu0 %v803, 127
        %v848 = vpop.permute.xlu0 %847
        %849 = vrot.lane.b32.xlu0 %v804, 127
        %v850 = vpop.permute.xlu0 %849
        %v851 = vsel %vm475, %v848, %v850
        %v852 = vsel %vm475, %v850, %v848
        %v853 = vmul.f32 %v851, %v481
        %v854 = vmul.f32 %v852, %v485
        %855 = vst [vmem:[#allocation3 + $0x50] sm:$0xff] %v853
        %856 = vst [vmem:[#allocation3 + $0x58] sm:$0xff] %v854
        %857 = vrot.lane.b32.xlu0 %v803, 113
        %v858 = vpop.permute.xlu0 %857
        %859 = vrot.lane.b32.xlu0 %v804, 113
        %v860 = vpop.permute.xlu0 %859
        %v861 = vsel %vm494, %v858, %v860
        %v862 = vsel %vm494, %v860, %v858
        %v863 = vmul.f32 %v861, %v500
        %v864 = vmul.f32 %v862, %v504
        %865 = vst [vmem:[#allocation3 + $0x60] sm:$0xff] %v863
        %866 = vst [vmem:[#allocation3 + $0x68] sm:$0xff] %v864
        %867 = vrot.lane.b32.xlu0 %v803, 112
        %v868 = vpop.permute.xlu0 %867
        %869 = vrot.lane.b32.xlu0 %v804, 112
        %v870 = vpop.permute.xlu0 %869
        %v871 = vsel %vm513, %v868, %v870
        %v872 = vsel %vm513, %v870, %v868
        %v873 = vmul.f32 %v871, %v519
        %v874 = vmul.f32 %v872, %v523
        %875 = vst [vmem:[#allocation3 + $0x70] sm:$0xff] %v873
        %876 = vst [vmem:[#allocation3 + $0x78] sm:$0xff] %v874
        %877 = vrot.lane.b32.xlu0 %v803, 111
        %v878 = vpop.permute.xlu0 %877
        %879 = vrot.lane.b32.xlu0 %v804, 111
        %v880 = vpop.permute.xlu0 %879
        %v881 = vsel %vm532, %v878, %v880
        %v882 = vsel %vm532, %v880, %v878
        %v883 = vmul.f32 %v881, %v538
        %v884 = vmul.f32 %v882, %v542
        %885 = vst [vmem:[#allocation3 + $0x80] sm:$0xff] %v883
        %886 = vst [vmem:[#allocation3 + $0x88] sm:$0xff] %v884
        %v887 = vld [vmem:[#allocation3] sm:$0xff]
        %v888 = vld [vmem:[#allocation3 + $0x8] sm:$0xff]
        %v889 = vld [vmem:[#allocation3 + $0x10] sm:$0xff]
        %v890 = vld [vmem:[#allocation3 + $0x18] sm:$0xff]
        %v891 = vld [vmem:[#allocation3 + $0x20] sm:$0xff]
        %v892 = vld [vmem:[#allocation3 + $0x28] sm:$0xff]
        %v893 = vld [vmem:[#allocation3 + $0x30] sm:$0xff]
        %v894 = vld [vmem:[#allocation3 + $0x38] sm:$0xff]
        %v895 = vld [vmem:[#allocation3 + $0x40] sm:$0xff]
        %v896 = vld [vmem:[#allocation3 + $0x48] sm:$0xff]
        %v897 = vld [vmem:[#allocation3 + $0x50] sm:$0xff]
        %v898 = vld [vmem:[#allocation3 + $0x58] sm:$0xff]
        %v899 = vld [vmem:[#allocation3 + $0x60] sm:$0xff]
        %v900 = vld [vmem:[#allocation3 + $0x68] sm:$0xff]
        %v901 = vld [vmem:[#allocation3 + $0x70] sm:$0xff]
        %v902 = vld [vmem:[#allocation3 + $0x78] sm:$0xff]
        %v903 = vld [vmem:[#allocation3 + $0x80] sm:$0xff]
        %v904 = vld [vmem:[#allocation3 + $0x88] sm:$0xff]
        %v905 = vpack.c.bf16 %v889, %v887
        %v906 = vpack.c.bf16 %v890, %v888
        %v907 = vpack.c.bf16 %v893, %v891
        %v908 = vpack.c.bf16 %v894, %v892
        %v909 = vpack.c.bf16 %v897, %v895
        %v910 = vpack.c.bf16 %v898, %v896
        %v911 = vpack.c.bf16 %v901, %v899
        %v912 = vpack.c.bf16 %v902, %v900
        %v913 = vpack.c.bf16 %v903, %v903
        %v914 = vpack.c.bf16 %v904, %v904
        %v915 = vld [vmem:[%s6] sm:$0xf]
        %v916 = vld [vmem:[%s7] sm:$0xff]
        %918 = vset.pattern.permute.xlu0 0
        %919 = vperm.xlu0 %918, %v916
        %v920 = vpop.permute.xlu0 %919
        %v923 = vsel %vm582, %v915, 0
        %v926 = vsel %vm586, %v913, 0
        %v929 = vsel %vm586, %v914, 0
        %931 = vmatprep.subr.bf16.mxu0 0
        %932 = vmatpush1.bf16.msra.mxu0 0
        %933 = vmatprep.subr.bf16.mxu0 0
        %934 = vmatpush1.bf16.msra.mxu0 0
        %935 = vmatprep.subr.bf16.mxu0 0
        %936 = vmatpush1.bf16.msra.mxu0 0
        %937 = vmatprep.subr.bf16.mxu0 %v929
        %938 = vmatpush1.bf16.msra.mxu0 %v926
        %939 = vmatprep.subr.bf16.mxu0 %v912
        %940 = vmatpush1.bf16.msra.mxu0 %v911
        %941 = vmatprep.subr.bf16.mxu0 %v910
        %942 = vmatpush1.bf16.msra.mxu0 %v909
        %943 = vmatprep.subr.bf16.mxu0 %v908
        %944 = vmatpush1.bf16.msra.mxu0 %v907
        %945 = vmatprep.subr.bf16.mxu0 %v906
        %946 = vmatpush1.bf16.msra.mxu0 %v905
        %947 = vmatprep.subr.bf16.mxu0 0
        %948 = vmatpush2.bf16.msra.mxu0 0
        %949 = vmatprep.subr.bf16.mxu0 0
        %950 = vmatpush2.bf16.msra.mxu0 0
        %951 = vmatprep.subr.bf16.mxu0 0
        %952 = vmatpush2.bf16.msra.mxu0 0
        %953 = vmatprep.subr.bf16.mxu0 0
        %954 = vmatpush2.bf16.msra.mxu0 0
        %955 = vmatprep.subr.bf16.mxu0 0
        %956 = vmatpush2.bf16.msra.mxu0 0
        %957 = vmatprep.subr.bf16.mxu0 0
        %958 = vmatpush2.bf16.msra.mxu0 0
        %959 = vmatprep.subr.bf16.mxu0 0
        %960 = vmatpush2.bf16.msra.mxu0 0
        %961 = vmatprep.subr.bf16.mxu0 0
        %962 = vmatpush2.bf16.msra.mxu0 0
        %963 = vmatprep.mubr.bf16.mxu0 0
        %964 = vmatmul.mubr.bf16.gmra.mxu0 %v923
        %v965 = vpop.f32.mrf.mxu0
        %v966 = vadd.f32 %v920, %v965
        %v967 = vpop.f32.mrf.mxu0
        %v968 = vadd.f32 %v920, %v967
        %v969 = vpop.f32.mrf.mxu0
        %v970 = vpop.f32.mrf.mxu0
        %971 = vdwg.mxu0
        %v972 = vmax.f32 %v966, 0.0
        %v973 = vmax.f32 %v968, 0.0
        %v974 = vadd.f32 %v972, %v385
        %v975 = vadd.f32 %v973, %v386
        %976 = vrot.lane.b32.xlu0 %v974, 17
        %v977 = vpop.permute.xlu0 %976
        %978 = vrot.lane.b32.xlu0 %v975, 17
        %v979 = vpop.permute.xlu0 %978
        %v980 = vsel %vm397, %v977, %v979
        %v981 = vsel %vm397, %v979, %v977
        %v982 = vmul.f32 %v981, %v403
        %v983 = vmul.f32 %v980, %v407
        %984 = vst [vmem:[#allocation3] sm:$0xff] %v982
        %985 = vst [vmem:[#allocation3 + $0x8] sm:$0xff] %v983
        %986 = vrot.lane.b32.xlu0 %v974, 16
        %v987 = vpop.permute.xlu0 %986
        %988 = vrot.lane.b32.xlu0 %v975, 16
        %v989 = vpop.permute.xlu0 %988
        %v990 = vsel %vm416, %v987, %v989
        %v991 = vsel %vm416, %v989, %v987
        %v992 = vmul.f32 %v991, %v422
        %v993 = vmul.f32 %v990, %v426
        %994 = vst [vmem:[#allocation3 + $0x10] sm:$0xff] %v992
        %995 = vst [vmem:[#allocation3 + $0x18] sm:$0xff] %v993
        %996 = vrot.lane.b32.xlu0 %v974, 15
        %v997 = vpop.permute.xlu0 %996
        %998 = vrot.lane.b32.xlu0 %v975, 15
        %v999 = vpop.permute.xlu0 %998
        %v1000 = vsel %vm435, %v997, %v999
        %v1001 = vsel %vm435, %v999, %v997
        %v1002 = vmul.f32 %v1001, %v441
        %v1003 = vmul.f32 %v1000, %v445
        %1004 = vst [vmem:[#allocation3 + $0x20] sm:$0xff] %v1002
        %1005 = vst [vmem:[#allocation3 + $0x28] sm:$0xff] %v1003
        %1006 = vrot.lane.b32.xlu0 %v974, 1
        %v1007 = vpop.permute.xlu0 %1006
        %1008 = vrot.lane.b32.xlu0 %v975, 1
        %v1009 = vpop.permute.xlu0 %1008
        %v1010 = vsel %vm454, %v1007, %v1009
        %v1011 = vsel %vm454, %v1009, %v1007
        %v1012 = vmul.f32 %v1011, %v460
        %v1013 = vmul.f32 %v1010, %v464
        %1014 = vst [vmem:[#allocation3 + $0x30] sm:$0xff] %v1012
        %1015 = vst [vmem:[#allocation3 + $0x38] sm:$0xff] %v1013
        %1016 = vst [vmem:[#allocation3 + $0x40] sm:$0xff] %v974
        %1017 = vst [vmem:[#allocation3 + $0x48] sm:$0xff] %v975
        %1018 = vrot.lane.b32.xlu0 %v974, 127
        %v1019 = vpop.permute.xlu0 %1018
        %1020 = vrot.lane.b32.xlu0 %v975, 127
        %v1021 = vpop.permute.xlu0 %1020
        %v1022 = vsel %vm475, %v1019, %v1021
        %v1023 = vsel %vm475, %v1021, %v1019
        %v1024 = vmul.f32 %v1022, %v481
        %v1025 = vmul.f32 %v1023, %v485
        %1026 = vst [vmem:[#allocation3 + $0x50] sm:$0xff] %v1024
        %1027 = vst [vmem:[#allocation3 + $0x58] sm:$0xff] %v1025
        %1028 = vrot.lane.b32.xlu0 %v974, 113
        %v1029 = vpop.permute.xlu0 %1028
        %1030 = vrot.lane.b32.xlu0 %v975, 113
        %v1031 = vpop.permute.xlu0 %1030
        %v1032 = vsel %vm494, %v1029, %v1031
        %v1033 = vsel %vm494, %v1031, %v1029
        %v1034 = vmul.f32 %v1032, %v500
        %v1035 = vmul.f32 %v1033, %v504
        %1036 = vst [vmem:[#allocation3 + $0x60] sm:$0xff] %v1034
        %1037 = vst [vmem:[#allocation3 + $0x68] sm:$0xff] %v1035
        %1038 = vrot.lane.b32.xlu0 %v974, 112
        %v1039 = vpop.permute.xlu0 %1038
        %1040 = vrot.lane.b32.xlu0 %v975, 112
        %v1041 = vpop.permute.xlu0 %1040
        %v1042 = vsel %vm513, %v1039, %v1041
        %v1043 = vsel %vm513, %v1041, %v1039
        %v1044 = vmul.f32 %v1042, %v519
        %v1045 = vmul.f32 %v1043, %v523
        %1046 = vst [vmem:[#allocation3 + $0x70] sm:$0xff] %v1044
        %1047 = vst [vmem:[#allocation3 + $0x78] sm:$0xff] %v1045
        %1048 = vrot.lane.b32.xlu0 %v974, 111
        %v1049 = vpop.permute.xlu0 %1048
        %1050 = vrot.lane.b32.xlu0 %v975, 111
        %v1051 = vpop.permute.xlu0 %1050
        %v1052 = vsel %vm532, %v1049, %v1051
        %v1053 = vsel %vm532, %v1051, %v1049
        %v1054 = vmul.f32 %v1052, %v538
        %v1055 = vmul.f32 %v1053, %v542
        %1056 = vst [vmem:[#allocation3 + $0x80] sm:$0xff] %v1054
        %1057 = vst [vmem:[#allocation3 + $0x88] sm:$0xff] %v1055
        %v1058 = vld [vmem:[#allocation3] sm:$0xff]
        %v1059 = vld [vmem:[#allocation3 + $0x8] sm:$0xff]
        %v1060 = vld [vmem:[#allocation3 + $0x10] sm:$0xff]
        %v1061 = vld [vmem:[#allocation3 + $0x18] sm:$0xff]
        %v1062 = vld [vmem:[#allocation3 + $0x20] sm:$0xff]
        %v1063 = vld [vmem:[#allocation3 + $0x28] sm:$0xff]
        %v1064 = vld [vmem:[#allocation3 + $0x30] sm:$0xff]
        %v1065 = vld [vmem:[#allocation3 + $0x38] sm:$0xff]
        %v1066 = vld [vmem:[#allocation3 + $0x40] sm:$0xff]
        %v1067 = vld [vmem:[#allocation3 + $0x48] sm:$0xff]
        %v1068 = vld [vmem:[#allocation3 + $0x50] sm:$0xff]
        %v1069 = vld [vmem:[#allocation3 + $0x58] sm:$0xff]
        %v1070 = vld [vmem:[#allocation3 + $0x60] sm:$0xff]
        %v1071 = vld [vmem:[#allocation3 + $0x68] sm:$0xff]
        %v1072 = vld [vmem:[#allocation3 + $0x70] sm:$0xff]
        %v1073 = vld [vmem:[#allocation3 + $0x78] sm:$0xff]
        %v1074 = vld [vmem:[#allocation3 + $0x80] sm:$0xff]
        %v1075 = vld [vmem:[#allocation3 + $0x88] sm:$0xff]
        %v1076 = vpack.c.bf16 %v1060, %v1058
        %v1077 = vpack.c.bf16 %v1061, %v1059
        %v1078 = vpack.c.bf16 %v1064, %v1062
        %v1079 = vpack.c.bf16 %v1065, %v1063
        %v1080 = vpack.c.bf16 %v1068, %v1066
        %v1081 = vpack.c.bf16 %v1069, %v1067
        %v1082 = vpack.c.bf16 %v1072, %v1070
        %v1083 = vpack.c.bf16 %v1073, %v1071
        %v1084 = vpack.c.bf16 %v1074, %v1074
        %v1085 = vpack.c.bf16 %v1075, %v1075
        %v1086 = vld [vmem:[%s8] sm:$0xf]
        %v1087 = vld [vmem:[%s9] sm:$0xff]
        %1089 = vset.pattern.permute.xlu0 0
        %1090 = vperm.xlu0 %1089, %v1087
        %v1091 = vpop.permute.xlu0 %1090
        %v1094 = vsel %vm582, %v1086, 0
        %v1097 = vsel %vm586, %v1084, 0
        %v1100 = vsel %vm586, %v1085, 0
        %1102 = vmatprep.subr.bf16.mxu0 0
        %1103 = vmatpush1.bf16.msra.mxu0 0
        %1104 = vmatprep.subr.bf16.mxu0 0
        %1105 = vmatpush1.bf16.msra.mxu0 0
        %1106 = vmatprep.subr.bf16.mxu0 0
        %1107 = vmatpush1.bf16.msra.mxu0 0
        %1108 = vmatprep.subr.bf16.mxu0 %v1100
        %1109 = vmatpush1.bf16.msra.mxu0 %v1097
        %1110 = vmatprep.subr.bf16.mxu0 %v1083
        %1111 = vmatpush1.bf16.msra.mxu0 %v1082
        %1112 = vmatprep.subr.bf16.mxu0 %v1081
        %1113 = vmatpush1.bf16.msra.mxu0 %v1080
        %1114 = vmatprep.subr.bf16.mxu0 %v1079
        %1115 = vmatpush1.bf16.msra.mxu0 %v1078
        %1116 = vmatprep.subr.bf16.mxu0 %v1077
        %1117 = vmatpush1.bf16.msra.mxu0 %v1076
        %1118 = vmatprep.subr.bf16.mxu0 0
        %1119 = vmatpush2.bf16.msra.mxu0 0
        %1120 = vmatprep.subr.bf16.mxu0 0
        %1121 = vmatpush2.bf16.msra.mxu0 0
        %1122 = vmatprep.subr.bf16.mxu0 0
        %1123 = vmatpush2.bf16.msra.mxu0 0
        %1124 = vmatprep.subr.bf16.mxu0 0
        %1125 = vmatpush2.bf16.msra.mxu0 0
        %1126 = vmatprep.subr.bf16.mxu0 0
        %1127 = vmatpush2.bf16.msra.mxu0 0
        %1128 = vmatprep.subr.bf16.mxu0 0
        %1129 = vmatpush2.bf16.msra.mxu0 0
        %1130 = vmatprep.subr.bf16.mxu0 0
        %1131 = vmatpush2.bf16.msra.mxu0 0
        %1132 = vmatprep.subr.bf16.mxu0 0
        %1133 = vmatpush2.bf16.msra.mxu0 0
        %1134 = vmatprep.mubr.bf16.mxu0 0
        %1135 = vmatmul.mubr.bf16.gmra.mxu0 %v1094
        %v1136 = vpop.f32.mrf.mxu0
        %v1137 = vadd.f32 %v1091, %v1136
        %v1138 = vpop.f32.mrf.mxu0
        %v1139 = vadd.f32 %v1091, %v1138
        %v1140 = vpop.f32.mrf.mxu0
        %v1141 = vpop.f32.mrf.mxu0
        %1142 = vdwg.mxu0
        %v1145 = vcombine.low %v1137, %v1139
        %1147 = vst [vmem:[%s375] sm:$0xff] %v1145
        %s1148 = sand.u32 %s250, 1
        %s1149 = scalar_lea.sflag [#allocation6], %s1148
        %s1150 = sand.u32 %s250, 1
        %s1151 = smul.addr %s1150, 8
        %s1152 = scalar_lea.vmem [#allocation7], %s1151
        // Predicated region
        $region65: #{tpu_custom_call.1} parent=59 // pred_check
          %p1153 = pneg %p260
        $region66: #{tpu_custom_call.1} parent=59 // pred_check_branch
          %1155 = sbr.rel (%p1153) target = $region68
        $region67: #{tpu_custom_call.1} parent=59 // pred_region
          %s1157 = ssub.s32 128, 128
          %1158 = vsyncadd %s1149, %s1157
          %s1159 = smul.addr %s27, 2
          %s1160 = smul.addr %s1159, 64
          %s1161 = scalar_lea.hbm %s10, %s1160
          %s1163 = sshll.u32 %s1152, 4
          %s1164 = int_to_ptr.vmem [resolvable:$true] %s1163
          %1166 = dma.vmem_to_hbm [thread:$0]  %s1164, 128, %s1161, %s1149
        $region68: #{tpu_custom_call.1} parent=59 // pred_fallthru
          _
      $region60: #{tpu_custom_call.1} parent=5 // pred_fallthru
        _
      %p1167 = scmp.le.s32.totalorder 2, %s22
      // Predicated region
      $region69: #{tpu_custom_call.1} parent=5 // pred_check
        %p1168 = pneg %p1167
      $region70: #{tpu_custom_call.1} parent=5 // pred_check_branch
        %1170 = sbr.rel (%p1168) target = $region72
      $region71: #{tpu_custom_call.1} parent=5 // pred_region
        %s1171 = ssub.s32 %s22, 2
        // Predicated region
        $region73: #{tpu_custom_call.1} parent=71 // pred_check
          %p1172 = pneg %p266
        $region74: #{tpu_custom_call.1} parent=71 // pred_check_branch
          %1174 = sbr.rel (%p1172) target = $region76
        $region75: #{tpu_custom_call.1} parent=71 // pred_region
          %s1175 = sand.u32 %s251, 1
          %s1176 = scalar_lea.sflag [#allocation6], %s1175
          %s1177 = sand.u32 %s251, 1
          %s1178 = smul.addr %s1177, 8
          %s1179 = scalar_lea.vmem [#allocation7], %s1178
          %1180 = dma.done %s1176, 128
        $region76: #{tpu_custom_call.1} parent=71 // pred_fallthru
          _
      $region72: #{tpu_custom_call.1} parent=5 // pred_fallthru
        _
    $region6: #{tpu_custom_call.1} parent=1 // loop_footer
      %s26 = sadd.s32 1, %s22
    $region7: #{tpu_custom_call.1} parent=1 // loop_footer_branch
      %21 = sbr.rel target = $region3
    $region8: #{tpu_custom_call.1} parent=1 // loop_exit
      _
    %1181 = vsyncpa [#allocation5], 1
    %s1182 = scalar_lea.sflag [#allocation5], 1
    %1183 = vsyncpa %s1182, 1
    %1184 = vsyncpa [#allocation6], 1
    %s1185 = scalar_lea.sflag [#allocation6], 1
    %1186 = vsyncpa %s1185, 1

</llo_original>
